<compile_context>
chip_gen: v7x
topology: tpu7x:2x2x1
jax: 0.10.0
libtpu: 0.0.40
codegen_flags: <defaults>
</compile_context>

<pallas_src>
import functools

import jax
import jax.numpy as jnp
from jax.experimental import pallas as pl
from jax.experimental.pallas import tpu as pltpu


EPS = 1e-5


# ---------------------------------------------------------------------------
# Fused kernel: GroupLayerNorm over channels-within-group + pointwise conv.
# ---------------------------------------------------------------------------
def prenorm_conv_kernel(x_ref, g_ref, b_ref, w_ref, bias_ref, o_ref, *, groups):
    # x_ref block:   (1, C, TN)   f32 activations
    # g_ref/b_ref:   (C, 1)       f32 norm scale / shift (resident)
    # w_ref:         (C, C)       bf16 pointwise-conv weight (resident)
    # bias_ref:      (C, 1)       f32 conv bias (resident)
    # o_ref block:   (1, C, TN)
    C, TN = x_ref.shape[1], x_ref.shape[2]
    D = C // groups

    x = x_ref[0].astype(jnp.float32)                      # (C, TN)
    xg = x.reshape(groups, D, TN)                         # (G, D, TN)

    mean = jnp.mean(xg, axis=1, keepdims=True)            # (G, 1, TN)
    xc = xg - mean                                        # computed once, reused
    var = jnp.mean(xc * xc, axis=1, keepdims=True)        # unbiased=False
    std = jnp.sqrt(var)
    inv = pl.reciprocal(std + EPS, approx=True)           # EUP slot (free-ish)

    normed = (xc * inv).reshape(C, TN)
    normed = normed * g_ref[...] + b_ref[...]             # per-channel affine

    # MXU matmul in bf16 with f32 accumulation, then bias + cast epilogue.
    y = jnp.dot(w_ref[...], normed.astype(jnp.bfloat16),
                preferred_element_type=jnp.float32)
    o_ref[0] = (y + bias_ref[...]).astype(o_ref.dtype)


def _pick_tn(n):
    """Largest lane-dense tile (multiple of 128) that divides N; else full N."""
    for tn in (512, 256, 128):
        if n % tn == 0:
            return tn
    return n


def pre_norm_forward(x, gln_g, gln_b, fn_w, fn_bias, groups):
    """x: (B, C, N); gln_g/gln_b: (1, groups, D, 1); fn_w: (C, C); fn_bias: (C,)."""
    B, C, N = x.shape
    assert C % groups == 0
    TN = _pick_tn(N)
    n_tiles = pl.cdiv(N, TN)

    g2 = gln_g.reshape(C, 1).astype(jnp.float32)
    b2 = gln_b.reshape(C, 1).astype(jnp.float32)
    w_bf16 = fn_w.astype(jnp.bfloat16)          # halve the weight DMA bytes
    bias2 = fn_bias.reshape(C, 1).astype(jnp.float32)

    # VMEM budget: double-buffered in/out activation tiles + resident params.
    act_tile = C * TN * 4
    needed = 2 * act_tile * 2 + C * C * 2 + 4 * C * 4 + (2 << 20)
    vmem_limit = int(min(max(needed, 8 << 20), 40 << 20))  # v7x-safe (64 MiB phys)

    kernel = functools.partial(prenorm_conv_kernel, groups=groups)

    return pl.pallas_call(
        kernel,
        out_shape=jax.ShapeDtypeStruct((B, C, N), x.dtype),
        grid_spec=pltpu.PrefetchScalarGridSpec(
            num_scalar_prefetch=0,
            grid=(B, n_tiles),
            in_specs=[
                pl.BlockSpec((1, C, TN), lambda bi, ni: (bi, 0, ni)),  # x tile
                pl.BlockSpec((C, 1), lambda bi, ni: (0, 0)),           # g (resident)
                pl.BlockSpec((C, 1), lambda bi, ni: (0, 0)),           # b (resident)
                pl.BlockSpec((C, C), lambda bi, ni: (0, 0)),           # W (resident)
                pl.BlockSpec((C, 1), lambda bi, ni: (0, 0)),           # bias (resident)
            ],
            out_specs=pl.BlockSpec((1, C, TN), lambda bi, ni: (bi, 0, ni)),
        ),
        compiler_params=pltpu.CompilerParams(
            dimension_semantics=("parallel", "parallel"),
            vmem_limit_bytes=vmem_limit,
        ),
    )(x, g2, b2, w_bf16, bias2)


# ---------------------------------------------------------------------------
# Pure-JAX reference (f32 everywhere, exact divide) for sanity checking.
# ---------------------------------------------------------------------------
def reference(x, gln_g, gln_b, fn_w, fn_bias, groups):
    B, C, N = x.shape
    D = C // groups
    x4 = x.reshape(B, groups, D, N).astype(jnp.float32)
    mean = jnp.mean(x4, axis=2, keepdims=True)
    var = jnp.var(x4, axis=2, keepdims=True)  # ddof=0 (unbiased=False)
    std = jnp.sqrt(var)
    normed = (x4 - mean) / (std + EPS) * gln_g + gln_b
    normed = normed.reshape(B, C, N)
    y = jnp.einsum("oc,bcn->bon", fn_w.astype(jnp.float32), normed)
    return y + fn_bias[None, :, None]


if __name__ == "__main__":
    B, groups, D, N = 2, 2, 64, 1024
    C = groups * D

    key = jax.random.PRNGKey(0)
    kx, kw, kb, kg, kbb = jax.random.split(key, 5)

    x = jax.random.normal(kx, (B, C, N), dtype=jnp.float32)

    # GroupLayerNorm params (shape as in __init__: (1, G, D, 1)); small
    # perturbations from the ones/zeros init so the affine path is exercised.
    gln_g = 1.0 + 0.1 * jax.random.normal(kg, (1, groups, D, 1), dtype=jnp.float32)
    gln_b = 0.01 * jax.random.normal(kbb, (1, groups, D, 1), dtype=jnp.float32)

    # Wrapped fn: pointwise Conv1d (dim -> dim).
    fn_w = jax.random.normal(kw, (C, C), dtype=jnp.float32) * 0.05
    fn_bias = jax.random.normal(kb, (C,), dtype=jnp.float32) * 0.01

    out = pre_norm_forward(x, gln_g, gln_b, fn_w, fn_bias, groups)
    out = jax.block_until_ready(out)

    ref = reference(x, gln_g, gln_b, fn_w, fn_bias, groups)
    assert out.shape == (B, C, N)
    # Tolerance accounts for bf16 MXU operands (f32 accumulate) and the
    # approximate EUP reciprocal; structural errors would be O(1).
    assert jnp.allclose(out, ref, atol=2e-2, rtol=2e-2), "mismatch vs reference"

    print("KERNEL_OK")
</pallas_src>

<mosaic_0001>
module attributes {stable_mosaic.version = 11 : i64} {
  func.func @prenorm_conv_kernel(%arg0: i32, %arg1: i32, %arg2: memref<1x128x512xf32, #tpu.memory_space<vmem>>, %arg3: memref<128x1xf32, #tpu.memory_space<vmem>>, %arg4: memref<128x1xf32, #tpu.memory_space<vmem>>, %arg5: memref<128x128xbf16, #tpu.memory_space<vmem>>, %arg6: memref<128x1xf32, #tpu.memory_space<vmem>>, %arg7: memref<1x128x512xf32, #tpu.memory_space<vmem>>) attributes {dimension_semantics = [#tpu.dimension_semantics<parallel>, #tpu.dimension_semantics<parallel>], iteration_bounds = array<i64: 2, 2>, scalar_prefetch = 0 : i64, scratch_operands = 0 : i64, tpu.core_type = #tpu.core_type<tc>, window_params = [{transform_indices = @transform_0, window_bounds = array<i64: 1, 128, 512>}, {pipeline_mode = #tpu.pipeline_mode<synchronous>, transform_indices = @transform_1, window_bounds = array<i64: 128, 1>}, {pipeline_mode = #tpu.pipeline_mode<synchronous>, transform_indices = @transform_2, window_bounds = array<i64: 128, 1>}, {pipeline_mode = #tpu.pipeline_mode<synchronous>, transform_indices = @transform_3, window_bounds = array<i64: 128, 128>}, {pipeline_mode = #tpu.pipeline_mode<synchronous>, transform_indices = @transform_4, window_bounds = array<i64: 128, 1>}, {transform_indices = @transform_5, window_bounds = array<i64: 1, 128, 512>}]} {
    %c0 = arith.constant 0 : index
    %c0_0 = arith.constant 0 : index
    %c0_1 = arith.constant 0 : index
    %0 = vector.load %arg2[%c0, %c0_0, %c0_1] : memref<1x128x512xf32, #tpu.memory_space<vmem>>, vector<1x128x512xf32>
    %1 = vector.shape_cast %0 : vector<1x128x512xf32> to vector<128x512xf32>
    %2 = vector.shape_cast %1 : vector<128x512xf32> to vector<2x64x512xf32>
    %cst = arith.constant dense<0.000000e+00> : vector<2x512xf32>
    %3 = vector.multi_reduction <add>, %2, %cst [1] : vector<2x64x512xf32> to vector<2x512xf32>
    %4 = vector.shape_cast %3 : vector<2x512xf32> to vector<2x1x512xf32>
    %cst_2 = arith.constant 6.400000e+01 : f32
    %5 = vector.broadcast %cst_2 : f32 to vector<2x1x512xf32>
    %6 = arith.divf %4, %5 : vector<2x1x512xf32>
    %7 = vector.broadcast %6 : vector<2x1x512xf32> to vector<2x64x512xf32>
    %8 = arith.subf %2, %7 : vector<2x64x512xf32>
    %9 = arith.mulf %8, %8 : vector<2x64x512xf32>
    %cst_3 = arith.constant dense<0.000000e+00> : vector<2x512xf32>
    %10 = vector.multi_reduction <add>, %9, %cst_3 [1] : vector<2x64x512xf32> to vector<2x512xf32>
    %11 = vector.shape_cast %10 : vector<2x512xf32> to vector<2x1x512xf32>
    %cst_4 = arith.constant 6.400000e+01 : f32
    %12 = vector.broadcast %cst_4 : f32 to vector<2x1x512xf32>
    %13 = arith.divf %11, %12 : vector<2x1x512xf32>
    %14 = math.sqrt %13 : vector<2x1x512xf32>
    %cst_5 = arith.constant 9.99999974E-6 : f32
    %15 = vector.broadcast %cst_5 : f32 to vector<2x1x512xf32>
    %16 = arith.addf %14, %15 : vector<2x1x512xf32>
    %17 = tpu.reciprocal %16 {approx = true} : vector<2x1x512xf32> -> vector<2x1x512xf32>
    %18 = vector.broadcast %17 : vector<2x1x512xf32> to vector<2x64x512xf32>
    %19 = arith.mulf %8, %18 : vector<2x64x512xf32>
    %20 = vector.shape_cast %19 : vector<2x64x512xf32> to vector<128x512xf32>
    %c0_6 = arith.constant 0 : index
    %c0_7 = arith.constant 0 : index
    %21 = vector.load %arg3[%c0_6, %c0_7] : memref<128x1xf32, #tpu.memory_space<vmem>>, vector<128x1xf32>
    %22 = vector.broadcast %21 : vector<128x1xf32> to vector<128x512xf32>
    %23 = arith.mulf %20, %22 : vector<128x512xf32>
    %c0_8 = arith.constant 0 : index
    %c0_9 = arith.constant 0 : index
    %24 = vector.load %arg4[%c0_8, %c0_9] : memref<128x1xf32, #tpu.memory_space<vmem>>, vector<128x1xf32>
    %25 = vector.broadcast %24 : vector<128x1xf32> to vector<128x512xf32>
    %26 = arith.addf %23, %25 : vector<128x512xf32>
    %c0_10 = arith.constant 0 : index
    %c0_11 = arith.constant 0 : index
    %27 = vector.load %arg5[%c0_10, %c0_11] : memref<128x128xbf16, #tpu.memory_space<vmem>>, vector<128x128xbf16>
    %28 = arith.truncf %26 : vector<128x512xf32> to vector<128x512xbf16>
    %cst_12 = arith.constant dense<0.000000e+00> : vector<128x512xf32>
    %29 = tpu.matmul %27, %28, %cst_12 {dimension_numbers = #tpu.dot_dimension_numbers<[1], [0], [0], [1], [0, 0, 1, 1], [], []>} : vector<128x128xbf16>, vector<128x512xbf16>, vector<128x512xf32> -> vector<128x512xf32>
    %c0_13 = arith.constant 0 : index
    %c0_14 = arith.constant 0 : index
    %30 = vector.load %arg6[%c0_13, %c0_14] : memref<128x1xf32, #tpu.memory_space<vmem>>, vector<128x1xf32>
    %31 = vector.broadcast %30 : vector<128x1xf32> to vector<128x512xf32>
    %32 = arith.addf %29, %31 : vector<128x512xf32>
    %c0_15 = arith.constant 0 : index
    %c0_16 = arith.constant 0 : index
    %c0_17 = arith.constant 0 : index
    %33 = vector.load %arg7[%c0_15, %c0_16, %c0_17] : memref<1x128x512xf32, #tpu.memory_space<vmem>>, vector<1x128x512xf32>
    %34 = vector.shape_cast %33 : vector<1x128x512xf32> to vector<128x512xf32>
    %35 = vector.shape_cast %32 : vector<128x512xf32> to vector<1x128x512xf32>
    tpu.vector_store %arg7[%c0_15, %c0_16, %c0_17], %35 {strides = array<i32>} : memref<1x128x512xf32, #tpu.memory_space<vmem>>, vector<1x128x512xf32>,
    return
  }
  func.func @transform_0(%arg0: i32, %arg1: i32) -> (i32, i32, i32) {
    %c0_i32 = arith.constant 0 : i32
    %c0_i32_0 = arith.constant 0 : i32
    return %arg0, %c0_i32, %arg1 : i32, i32, i32
  }
  func.func @transform_1(%arg0: i32, %arg1: i32) -> (i32, i32) {
    %c0_i32 = arith.constant 0 : i32
    %c0_i32_0 = arith.constant 0 : i32
    %c0_i32_1 = arith.constant 0 : i32
    return %c0_i32, %c0_i32_0 : i32, i32
  }
  func.func @transform_2(%arg0: i32, %arg1: i32) -> (i32, i32) {
    %c0_i32 = arith.constant 0 : i32
    %c0_i32_0 = arith.constant 0 : i32
    %c0_i32_1 = arith.constant 0 : i32
    return %c0_i32, %c0_i32_0 : i32, i32
  }
  func.func @transform_3(%arg0: i32, %arg1: i32) -> (i32, i32) {
    %c0_i32 = arith.constant 0 : i32
    %c0_i32_0 = arith.constant 0 : i32
    %c0_i32_1 = arith.constant 0 : i32
    return %c0_i32, %c0_i32_0 : i32, i32
  }
  func.func @transform_4(%arg0: i32, %arg1: i32) -> (i32, i32) {
    %c0_i32 = arith.constant 0 : i32
    %c0_i32_0 = arith.constant 0 : i32
    %c0_i32_1 = arith.constant 0 : i32
    return %c0_i32, %c0_i32_0 : i32, i32
  }
  func.func @transform_5(%arg0: i32, %arg1: i32) -> (i32, i32, i32) {
    %c0_i32 = arith.constant 0 : i32
    %c0_i32_0 = arith.constant 0 : i32
    return %arg0, %c0_i32, %arg1 : i32, i32, i32
  }
}

</mosaic_0001>

<llo_original>
// kernel: tpu_custom_call.1
$region0: #{tpu_custom_call.1}
  #allocation0 [shape = 'u32[]', space=smem, size = 0x4, offset = 0x4, fixed_abs, tag = 'smem constant byte address 0x4 - core index']
  #allocation1 [shape = 'u32[144,128]{1,0:T(1,128)}', space=vmem, size = 0x12000, scoped, tag = 'internal scratch']
  %s0 = inlined_call_operand.hbm [shape: f32[2,128,1024], index: 0, kind: input, shape index: {}]
  %s1 = inlined_call_operand.vmem [shape: f32[128,1], index: 1, kind: input, shape index: {}]
  %s2 = inlined_call_operand.vmem [shape: f32[128,1], index: 2, kind: input, shape index: {}]
  %s3 = inlined_call_operand.vmem [shape: bf16[128,128], index: 3, kind: input, shape index: {}]
  %s4 = inlined_call_operand.vmem [shape: f32[128,1], index: 4, kind: input, shape index: {}]
  %s5 = inlined_call_operand.hbm [shape: f32[2,128,1024], index: 5, kind: output, shape index: {}]
  %s6 = sld [smem:[#allocation0]]
  $region57: #{tpu_custom_call.1} parent=0
    _
  %s8 = ssub.s32 1, %s6
  %s9 = scalar_select 0, %s8, %s6
  $region1: #{tpu_custom_call.1} parent=0
    #allocation2 [shape = 'u8[524288]{0}', space=vmem, size = 0x80000, scoped, tag = 'input window, operand 0']
    #allocation3 [shape = 's32[2]{0}', space=sflag, size = 0x8, scoped, tag = 'scoped memory for tpu_custom_call.1']
    #allocation4 [shape = 's32[2]{0}', space=sflag, size = 0x8, scoped, tag = 'scoped memory for tpu_custom_call.1']
    #allocation5 [shape = 'u8[524288]{0}', space=vmem, size = 0x80000, scoped, tag = 'output window, operand 0']
    %10 = vsyncpa [#allocation3], 0
    %s11 = scalar_lea.sflag [#allocation3], 1
    %12 = vsyncpa %s11, 0
    %13 = vsyncpa [#allocation4], 0
    %s14 = scalar_lea.sflag [#allocation4], 1
    %15 = vsyncpa %s14, 0
    loop: start=0, step=1, limit=6
    $region2: #{tpu_custom_call.1} parent=1 // loop_pre_header
      _
    $region3: #{tpu_custom_call.1} parent=1 // loop_header
      %s17 = sphi 0, %s21
      %p18 = scmp.ge.s32.totalorder %s17, 6
      %s24 = sphi 0, %s36
      %s25 = sphi 0, %s32
      %s26 = sphi 0, %s24
      %s27 = sphi 0, %s25
      %s28 = sphi 0, %s26
      %s29 = sphi 0, %s27
      %s41 = sphi 0, %s43
      %s44 = sphi 0, %s41
      %s45 = sphi 0, %s44
      %s61 = sphi 0, %s45
      %s65 = sphi 0, %s65
      %s67 = sphi 0, %s65
      %s68 = sphi 0, %s67
      %s82 = sphi 0, %s68
      %s86 = sphi 0, %s86
      %s88 = sphi 0, %s86
      %s89 = sphi 0, %s88
      %s103 = sphi 0, %s89
      %s107 = sphi 0, %s107
      %s109 = sphi 0, %s107
      %s110 = sphi 0, %s109
      %s124 = sphi 0, %s110
      %s128 = sphi 0, %s128
      %s130 = sphi 0, %s128
      %s131 = sphi 0, %s130
      %s145 = sphi 0, %s131
      %s153 = sphi 0, %s155
      %s156 = sphi 0, %s153
      %s157 = sphi 0, %s156
      %s173 = sphi 0, %s157
    $region4: #{tpu_custom_call.1} parent=1 // loop_header_branch
      %20 = sbr.rel (%p18) target = $region8
    $region5: #{tpu_custom_call.1} parent=1 // loop_body
      %s22 = ssub.s32 %s17, 1
      %s23 = ssub.s32 %s17, 2
      %s30 = sadd.s32 1, %s25
      %p31 = scmp.ge.s32.totalorder %s30, 2
      %s32 = scalar_select %p31, 0, %s30
      %s33 = sadd.s32 1, %s24
      %s34 = scalar_select %p31, %s33, %s24
      %p35 = scmp.ge.s32.totalorder %s34, 2
      %s36 = scalar_select %p35, 0, %s34
      %s37 = ssub.s32 %s24, %s36
      %s38 = ssub.s32 %s25, %s32
      %s39 = sor.u32 %s37, %s38
      %p40 = scmp.eq.s32.totalorder %s39, 0
      %s42 = sadd.s32 %s41, 1
      %s43 = scalar_select %p40, %s41, %s42
      %p46 = pneg %p40
      %p47 = scmp.eq.s32.totalorder %s17, 3
      %p48 = por %p46, %p47
      %p49 = scmp.ne.s32.totalorder %s41, %s44
      %p50 = scmp.eq.s32.totalorder %s17, 0
      %p51 = por %p49, %p50
      %p52 = scmp.ne.s32.totalorder %s41, %s44
      %p53 = scmp.eq.s32.totalorder %s22, 3
      %p54 = por %p52, %p53
      %p55 = scmp.ne.s32.totalorder %s44, %s45
      %p56 = scmp.eq.s32.totalorder %s22, 0
      %p57 = por %p55, %p56
      %p58 = scmp.ne.s32.totalorder %s44, %s45
      %p59 = scmp.eq.s32.totalorder %s23, 3
      %p60 = por %p58, %p59
      %p62 = scmp.ne.s32.totalorder %s45, %s61
      %p63 = scmp.eq.s32.totalorder %s23, 0
      %p64 = por %p62, %p63
      %s66 = sadd.s32 %s65, 1
      %p69 = scmp.eq.s32.totalorder %s17, 3
      %p70 = scmp.ne.s32.totalorder %s65, %s67
      %p71 = scmp.eq.s32.totalorder %s17, 0
      %p72 = por %p70, %p71
      %p73 = scmp.ne.s32.totalorder %s65, %s67
      %p74 = scmp.eq.s32.totalorder %s22, 3
      %p75 = por %p73, %p74
      %p76 = scmp.ne.s32.totalorder %s67, %s68
      %p77 = scmp.eq.s32.totalorder %s22, 0
      %p78 = por %p76, %p77
      %p79 = scmp.ne.s32.totalorder %s67, %s68
      %p80 = scmp.eq.s32.totalorder %s23, 3
      %p81 = por %p79, %p80
      %p83 = scmp.ne.s32.totalorder %s68, %s82
      %p84 = scmp.eq.s32.totalorder %s23, 0
      %p85 = por %p83, %p84
      %s87 = sadd.s32 %s86, 1
      %p90 = scmp.eq.s32.totalorder %s17, 3
      %p91 = scmp.ne.s32.totalorder %s86, %s88
      %p92 = scmp.eq.s32.totalorder %s17, 0
      %p93 = por %p91, %p92
      %p94 = scmp.ne.s32.totalorder %s86, %s88
      %p95 = scmp.eq.s32.totalorder %s22, 3
      %p96 = por %p94, %p95
      %p97 = scmp.ne.s32.totalorder %s88, %s89
      %p98 = scmp.eq.s32.totalorder %s22, 0
      %p99 = por %p97, %p98
      %p100 = scmp.ne.s32.totalorder %s88, %s89
      %p101 = scmp.eq.s32.totalorder %s23, 3
      %p102 = por %p100, %p101
      %p104 = scmp.ne.s32.totalorder %s89, %s103
      %p105 = scmp.eq.s32.totalorder %s23, 0
      %p106 = por %p104, %p105
      %s108 = sadd.s32 %s107, 1
      %p111 = scmp.eq.s32.totalorder %s17, 3
      %p112 = scmp.ne.s32.totalorder %s107, %s109
      %p113 = scmp.eq.s32.totalorder %s17, 0
      %p114 = por %p112, %p113
      %p115 = scmp.ne.s32.totalorder %s107, %s109
      %p116 = scmp.eq.s32.totalorder %s22, 3
      %p117 = por %p115, %p116
      %p118 = scmp.ne.s32.totalorder %s109, %s110
      %p119 = scmp.eq.s32.totalorder %s22, 0
      %p120 = por %p118, %p119
      %p121 = scmp.ne.s32.totalorder %s109, %s110
      %p122 = scmp.eq.s32.totalorder %s23, 3
      %p123 = por %p121, %p122
      %p125 = scmp.ne.s32.totalorder %s110, %s124
      %p126 = scmp.eq.s32.totalorder %s23, 0
      %p127 = por %p125, %p126
      %s129 = sadd.s32 %s128, 1
      %p132 = scmp.eq.s32.totalorder %s17, 3
      %p133 = scmp.ne.s32.totalorder %s128, %s130
      %p134 = scmp.eq.s32.totalorder %s17, 0
      %p135 = por %p133, %p134
      %p136 = scmp.ne.s32.totalorder %s128, %s130
      %p137 = scmp.eq.s32.totalorder %s22, 3
      %p138 = por %p136, %p137
      %p139 = scmp.ne.s32.totalorder %s130, %s131
      %p140 = scmp.eq.s32.totalorder %s22, 0
      %p141 = por %p139, %p140
      %p142 = scmp.ne.s32.totalorder %s130, %s131
      %p143 = scmp.eq.s32.totalorder %s23, 3
      %p144 = por %p142, %p143
      %p146 = scmp.ne.s32.totalorder %s131, %s145
      %p147 = scmp.eq.s32.totalorder %s23, 0
      %p148 = por %p146, %p147
      %s149 = ssub.s32 %s24, %s36
      %s150 = ssub.s32 %s25, %s32
      %s151 = sor.u32 %s149, %s150
      %p152 = scmp.eq.s32.totalorder %s151, 0
      %s154 = sadd.s32 %s153, 1
      %s155 = scalar_select %p152, %s153, %s154
      %p158 = pneg %p152
      %p159 = scmp.eq.s32.totalorder %s17, 3
      %p160 = por %p158, %p159
      %p161 = scmp.ne.s32.totalorder %s153, %s156
      %p162 = scmp.eq.s32.totalorder %s17, 0
      %p163 = por %p161, %p162
      %p164 = scmp.ne.s32.totalorder %s153, %s156
      %p165 = scmp.eq.s32.totalorder %s22, 3
      %p166 = por %p164, %p165
      %p167 = scmp.ne.s32.totalorder %s156, %s157
      %p168 = scmp.eq.s32.totalorder %s22, 0
      %p169 = por %p167, %p168
      %p170 = scmp.ne.s32.totalorder %s156, %s157
      %p171 = scmp.eq.s32.totalorder %s23, 3
      %p172 = por %p170, %p171
      %p174 = scmp.ne.s32.totalorder %s157, %s173
      %p175 = scmp.eq.s32.totalorder %s23, 0
      %p176 = por %p174, %p175
      %p177 = scmp.le.s32.totalorder 1, %s17
      %p178 = scmp.lt.s32.totalorder %s17, 5
      %p179 = pnand %p177, %p178
      %p180 = pneg %p179
      // Predicated region
      $region9: #{tpu_custom_call.1} parent=5 // pred_check
        _
      $region10: #{tpu_custom_call.1} parent=5 // pred_check_branch
        %182 = sbr.rel (%p179) target = $region12
      $region11: #{tpu_custom_call.1} parent=5 // pred_region
        %s183 = ssub.s32 %s17, 1
        // Predicated region
        $region13: #{tpu_custom_call.1} parent=11 // pred_check
          %p184 = pneg %p78
        $region14: #{tpu_custom_call.1} parent=11 // pred_check_branch
          %186 = sbr.rel (%p184) target = $region16
        $region15: #{tpu_custom_call.1} parent=11 // pred_region
          _
        $region16: #{tpu_custom_call.1} parent=11 // pred_fallthru
          _
        // Predicated region
        $region17: #{tpu_custom_call.1} parent=11 // pred_check
          %p187 = pneg %p99
        $region18: #{tpu_custom_call.1} parent=11 // pred_check_branch
          %189 = sbr.rel (%p187) target = $region20
        $region19: #{tpu_custom_call.1} parent=11 // pred_region
          _
        $region20: #{tpu_custom_call.1} parent=11 // pred_fallthru
          _
        // Predicated region
        $region21: #{tpu_custom_call.1} parent=11 // pred_check
          %p190 = pneg %p120
        $region22: #{tpu_custom_call.1} parent=11 // pred_check_branch
          %192 = sbr.rel (%p190) target = $region24
        $region23: #{tpu_custom_call.1} parent=11 // pred_region
          _
        $region24: #{tpu_custom_call.1} parent=11 // pred_fallthru
          _
        // Predicated region
        $region25: #{tpu_custom_call.1} parent=11 // pred_check
          %p193 = pneg %p141
        $region26: #{tpu_custom_call.1} parent=11 // pred_check_branch
          %195 = sbr.rel (%p193) target = $region28
        $region27: #{tpu_custom_call.1} parent=11 // pred_region
          _
        $region28: #{tpu_custom_call.1} parent=11 // pred_fallthru
          _
      $region12: #{tpu_custom_call.1} parent=5 // pred_fallthru
        _
      %p196 = scmp.lt.s32.totalorder %s17, 4
      // Predicated region
      $region29: #{tpu_custom_call.1} parent=5 // pred_check
        %p197 = pneg %p196
      $region30: #{tpu_custom_call.1} parent=5 // pred_check_branch
        %199 = sbr.rel (%p197) target = $region32
      $region31: #{tpu_custom_call.1} parent=5 // pred_region
        // Predicated region
        $region33: #{tpu_custom_call.1} parent=31 // pred_check
          %p200 = pneg %p51
        $region34: #{tpu_custom_call.1} parent=31 // pred_check_branch
          %202 = sbr.rel (%p200) target = $region36
        $region35: #{tpu_custom_call.1} parent=31 // pred_region
          %s203 = sand.u32 %s41, 1
          %s204 = scalar_lea.sflag [#allocation3], %s203
          %s205 = sand.u32 %s41, 1
          %s206 = smul.addr %s205, 512
          %s207 = scalar_lea.vmem [#allocation2], %s206
          %s208 = smul.u32 4, %s25
          %s210 = ssub.s32 8192, 8192
          %211 = vsyncadd %s204, %s210
          %s212 = smul.addr %s24, 128
          %s213 = sadd.s32 %s208, %s212
          %s214 = smul.addr %s213, 128
          %s215 = scalar_lea.hbm %s0, %s214
          %s216 = sshll.u32 %s207, 4
          %s217 = int_to_ptr.vmem [resolvable:$true] %s216
          %222 = dma.hbm_to_vmem [thread:$0]  %s215, 8192, %s217, %s204, 1024, 512, 32
        $region36: #{tpu_custom_call.1} parent=31 // pred_fallthru
          _
      $region32: #{tpu_custom_call.1} parent=5 // pred_fallthru
        _
      %p223 = scmp.le.s32.totalorder 1, %s17
      %p224 = scmp.lt.s32.totalorder %s17, 5
      %p225 = pnand %p223, %p224
      %p226 = pneg %p225
      // Predicated region
      $region37: #{tpu_custom_call.1} parent=5 // pred_check
        _
      $region38: #{tpu_custom_call.1} parent=5 // pred_check_branch
        %228 = sbr.rel (%p225) target = $region40
      $region39: #{tpu_custom_call.1} parent=5 // pred_region
        %s229 = ssub.s32 %s17, 1
        %s230 = sand.u32 %s44, 1
        %s231 = scalar_lea.sflag [#allocation3], %s230
        %s232 = sand.u32 %s44, 1
        %s233 = smul.addr %s232, 512
        %s234 = scalar_lea.vmem [#allocation2], %s233
        // Predicated region
        $region41: #{tpu_custom_call.1} parent=39 // pred_check
          %p235 = pneg %p57
        $region42: #{tpu_custom_call.1} parent=39 // pred_check_branch
          %237 = sbr.rel (%p235) target = $region44
        $region43: #{tpu_custom_call.1} parent=39 // pred_region
          %238 = dma.done %s231, 8192
        $region44: #{tpu_custom_call.1} parent=39 // pred_fallthru
          _
        %s239 = sand.u32 %s44, 1
        %s240 = scalar_lea.sflag [#allocation3], %s239
        %s241 = sand.u32 %s44, 1
        %s242 = smul.addr %s241, 512
        %s243 = scalar_lea.vmem [#allocation2], %s242
        %p244 = pneg %p57
        %p245 = pneg %p54
        %p246 = pneg %p78
        %p247 = pneg %p75
        %p248 = pneg %p99
        %p249 = pneg %p96
        %p250 = pneg %p120
        %p251 = pneg %p117
        %p252 = pneg %p141
        %p253 = pneg %p138
        %p254 = pneg %p169
        %p255 = pneg %p166
        %s256 = sand.u32 %s156, 1
        %s257 = scalar_lea.sflag [#allocation4], %s256
        %s258 = sand.u32 %s156, 1
        %s259 = smul.addr %s258, 512
        %s260 = scalar_lea.vmem [#allocation5], %s259
        %s261 = smul.u32 4, %s27
        %s262 = smul.u32 4, %s27
        %v264 = vld [vmem:[%s234] sm:$0xff]
        %v265 = vld [vmem:[%s234 + $0x8] sm:$0xff]
        %v266 = vld [vmem:[%s234 + $0x10] sm:$0xff]
        %v267 = vld [vmem:[%s234 + $0x18] sm:$0xff]
        %v268 = vld [vmem:[%s234 + $0x20] sm:$0xff]
        %v269 = vld [vmem:[%s234 + $0x28] sm:$0xff]
        %v270 = vld [vmem:[%s234 + $0x30] sm:$0xff]
        %v271 = vld [vmem:[%s234 + $0x38] sm:$0xff]
        %v272 = vld [vmem:[%s234 + $0x40] sm:$0xff]
        %v273 = vld [vmem:[%s234 + $0x48] sm:$0xff]
        %v274 = vld [vmem:[%s234 + $0x50] sm:$0xff]
        %v275 = vld [vmem:[%s234 + $0x58] sm:$0xff]
        %v276 = vld [vmem:[%s234 + $0x60] sm:$0xff]
        %v277 = vld [vmem:[%s234 + $0x68] sm:$0xff]
        %v278 = vld [vmem:[%s234 + $0x70] sm:$0xff]
        %v279 = vld [vmem:[%s234 + $0x78] sm:$0xff]
        %v280 = vld [vmem:[%s234 + $0x80] sm:$0xff]
        %v281 = vld [vmem:[%s234 + $0x88] sm:$0xff]
        %v282 = vld [vmem:[%s234 + $0x90] sm:$0xff]
        %v283 = vld [vmem:[%s234 + $0x98] sm:$0xff]
        %v284 = vld [vmem:[%s234 + $0xa0] sm:$0xff]
        %v285 = vld [vmem:[%s234 + $0xa8] sm:$0xff]
        %v286 = vld [vmem:[%s234 + $0xb0] sm:$0xff]
        %v287 = vld [vmem:[%s234 + $0xb8] sm:$0xff]
        %v288 = vld [vmem:[%s234 + $0xc0] sm:$0xff]
        %v289 = vld [vmem:[%s234 + $0xc8] sm:$0xff]
        %v290 = vld [vmem:[%s234 + $0xd0] sm:$0xff]
        %v291 = vld [vmem:[%s234 + $0xd8] sm:$0xff]
        %v292 = vld [vmem:[%s234 + $0xe0] sm:$0xff]
        %v293 = vld [vmem:[%s234 + $0xe8] sm:$0xff]
        %v294 = vld [vmem:[%s234 + $0xf0] sm:$0xff]
        %v295 = vld [vmem:[%s234 + $0xf8] sm:$0xff]
        %v296 = vld [vmem:[%s234 + $0x100] sm:$0xff]
        %v297 = vld [vmem:[%s234 + $0x108] sm:$0xff]
        %v298 = vld [vmem:[%s234 + $0x110] sm:$0xff]
        %v299 = vld [vmem:[%s234 + $0x118] sm:$0xff]
        %v300 = vld [vmem:[%s234 + $0x120] sm:$0xff]
        %v301 = vld [vmem:[%s234 + $0x128] sm:$0xff]
        %v302 = vld [vmem:[%s234 + $0x130] sm:$0xff]
        %v303 = vld [vmem:[%s234 + $0x138] sm:$0xff]
        %v304 = vld [vmem:[%s234 + $0x140] sm:$0xff]
        %v305 = vld [vmem:[%s234 + $0x148] sm:$0xff]
        %v306 = vld [vmem:[%s234 + $0x150] sm:$0xff]
        %v307 = vld [vmem:[%s234 + $0x158] sm:$0xff]
        %v308 = vld [vmem:[%s234 + $0x160] sm:$0xff]
        %v309 = vld [vmem:[%s234 + $0x168] sm:$0xff]
        %v310 = vld [vmem:[%s234 + $0x170] sm:$0xff]
        %v311 = vld [vmem:[%s234 + $0x178] sm:$0xff]
        %v312 = vld [vmem:[%s234 + $0x180] sm:$0xff]
        %v313 = vld [vmem:[%s234 + $0x188] sm:$0xff]
        %v314 = vld [vmem:[%s234 + $0x190] sm:$0xff]
        %v315 = vld [vmem:[%s234 + $0x198] sm:$0xff]
        %v316 = vld [vmem:[%s234 + $0x1a0] sm:$0xff]
        %v317 = vld [vmem:[%s234 + $0x1a8] sm:$0xff]
        %v318 = vld [vmem:[%s234 + $0x1b0] sm:$0xff]
        %v319 = vld [vmem:[%s234 + $0x1b8] sm:$0xff]
        %v320 = vld [vmem:[%s234 + $0x1c0] sm:$0xff]
        %v321 = vld [vmem:[%s234 + $0x1c8] sm:$0xff]
        %v322 = vld [vmem:[%s234 + $0x1d0] sm:$0xff]
        %v323 = vld [vmem:[%s234 + $0x1d8] sm:$0xff]
        %v324 = vld [vmem:[%s234 + $0x1e0] sm:$0xff]
        %v325 = vld [vmem:[%s234 + $0x1e8] sm:$0xff]
        %v326 = vld [vmem:[%s234 + $0x1f0] sm:$0xff]
        %v327 = vld [vmem:[%s234 + $0x1f8] sm:$0xff]
        %v328 = vadd.f32 %v264, %v268
        %v329 = vadd.f32 %v328, %v272
        %v330 = vadd.f32 %v329, %v276
        %v331 = vadd.f32 %v330, %v280
        %v332 = vadd.f32 %v331, %v284
        %v333 = vadd.f32 %v332, %v288
        %v334 = vadd.f32 %v333, %v292
        %v335 = vrot.slane %v334, 4
        %v336 = vadd.f32 %v334, %v335
        %v337 = vrot.slane %v336, 2
        %v338 = vadd.f32 %v336, %v337
        %v339 = vrot.slane %v338, 1
        %v340 = vadd.f32 %v338, %v339
        %v341 = vadd.f32 %v265, %v269
        %v342 = vadd.f32 %v341, %v273
        %v343 = vadd.f32 %v342, %v277
        %v344 = vadd.f32 %v343, %v281
        %v345 = vadd.f32 %v344, %v285
        %v346 = vadd.f32 %v345, %v289
        %v347 = vadd.f32 %v346, %v293
        %v348 = vrot.slane %v347, 4
        %v349 = vadd.f32 %v347, %v348
        %v350 = vrot.slane %v349, 2
        %v351 = vadd.f32 %v349, %v350
        %v352 = vrot.slane %v351, 1
        %v353 = vadd.f32 %v351, %v352
        %v354 = vadd.f32 %v266, %v270
        %v355 = vadd.f32 %v354, %v274
        %v356 = vadd.f32 %v355, %v278
        %v357 = vadd.f32 %v356, %v282
        %v358 = vadd.f32 %v357, %v286
        %v359 = vadd.f32 %v358, %v290
        %v360 = vadd.f32 %v359, %v294
        %v361 = vrot.slane %v360, 4
        %v362 = vadd.f32 %v360, %v361
        %v363 = vrot.slane %v362, 2
        %v364 = vadd.f32 %v362, %v363
        %v365 = vrot.slane %v364, 1
        %v366 = vadd.f32 %v364, %v365
        %v367 = vadd.f32 %v267, %v271
        %v368 = vadd.f32 %v367, %v275
        %v369 = vadd.f32 %v368, %v279
        %v370 = vadd.f32 %v369, %v283
        %v371 = vadd.f32 %v370, %v287
        %v372 = vadd.f32 %v371, %v291
        %v373 = vadd.f32 %v372, %v295
        %v374 = vrot.slane %v373, 4
        %v375 = vadd.f32 %v373, %v374
        %v376 = vrot.slane %v375, 2
        %v377 = vadd.f32 %v375, %v376
        %v378 = vrot.slane %v377, 1
        %v379 = vadd.f32 %v377, %v378
        %v380 = vadd.f32 %v296, %v300
        %v381 = vadd.f32 %v380, %v304
        %v382 = vadd.f32 %v381, %v308
        %v383 = vadd.f32 %v382, %v312
        %v384 = vadd.f32 %v383, %v316
        %v385 = vadd.f32 %v384, %v320
        %v386 = vadd.f32 %v385, %v324
        %v387 = vrot.slane %v386, 4
        %v388 = vadd.f32 %v386, %v387
        %v389 = vrot.slane %v388, 2
        %v390 = vadd.f32 %v388, %v389
        %v391 = vrot.slane %v390, 1
        %v392 = vadd.f32 %v390, %v391
        %v393 = vadd.f32 %v297, %v301
        %v394 = vadd.f32 %v393, %v305
        %v395 = vadd.f32 %v394, %v309
        %v396 = vadd.f32 %v395, %v313
        %v397 = vadd.f32 %v396, %v317
        %v398 = vadd.f32 %v397, %v321
        %v399 = vadd.f32 %v398, %v325
        %v400 = vrot.slane %v399, 4
        %v401 = vadd.f32 %v399, %v400
        %v402 = vrot.slane %v401, 2
        %v403 = vadd.f32 %v401, %v402
        %v404 = vrot.slane %v403, 1
        %v405 = vadd.f32 %v403, %v404
        %v406 = vadd.f32 %v298, %v302
        %v407 = vadd.f32 %v406, %v306
        %v408 = vadd.f32 %v407, %v310
        %v409 = vadd.f32 %v408, %v314
        %v410 = vadd.f32 %v409, %v318
        %v411 = vadd.f32 %v410, %v322
        %v412 = vadd.f32 %v411, %v326
        %v413 = vrot.slane %v412, 4
        %v414 = vadd.f32 %v412, %v413
        %v415 = vrot.slane %v414, 2
        %v416 = vadd.f32 %v414, %v415
        %v417 = vrot.slane %v416, 1
        %v418 = vadd.f32 %v416, %v417
        %v419 = vadd.f32 %v299, %v303
        %v420 = vadd.f32 %v419, %v307
        %v421 = vadd.f32 %v420, %v311
        %v422 = vadd.f32 %v421, %v315
        %v423 = vadd.f32 %v422, %v319
        %v424 = vadd.f32 %v423, %v323
        %v425 = vadd.f32 %v424, %v327
        %v426 = vrot.slane %v425, 4
        %v427 = vadd.f32 %v425, %v426
        %v428 = vrot.slane %v427, 2
        %v429 = vadd.f32 %v427, %v428
        %v430 = vrot.slane %v429, 1
        %v431 = vadd.f32 %v429, %v430
        %v432 = vrcp.pop 64.0
        %v433 = vmul.f32 %v340, %v432
        %v434 = vmul.f32 %v353, %v432
        %v435 = vmul.f32 %v366, %v432
        %v436 = vmul.f32 %v379, %v432
        %v437 = vmul.f32 %v392, %v432
        %v438 = vmul.f32 %v405, %v432
        %v439 = vmul.f32 %v418, %v432
        %v440 = vmul.f32 %v431, %v432
        %v441 = vsub.f32 %v264, %v433
        %v442 = vsub.f32 %v265, %v434
        %v443 = vsub.f32 %v266, %v435
        %v444 = vsub.f32 %v267, %v436
        %v445 = vsub.f32 %v268, %v433
        %v446 = vsub.f32 %v269, %v434
        %v447 = vsub.f32 %v270, %v435
        %v448 = vsub.f32 %v271, %v436
        %v449 = vsub.f32 %v272, %v433
        %v450 = vsub.f32 %v273, %v434
        %v451 = vsub.f32 %v274, %v435
        %v452 = vsub.f32 %v275, %v436
        %v453 = vsub.f32 %v276, %v433
        %v454 = vsub.f32 %v277, %v434
        %v455 = vsub.f32 %v278, %v435
        %v456 = vsub.f32 %v279, %v436
        %v457 = vsub.f32 %v280, %v433
        %v458 = vsub.f32 %v281, %v434
        %v459 = vsub.f32 %v282, %v435
        %v460 = vsub.f32 %v283, %v436
        %v461 = vsub.f32 %v284, %v433
        %v462 = vsub.f32 %v285, %v434
        %v463 = vsub.f32 %v286, %v435
        %v464 = vsub.f32 %v287, %v436
        %v465 = vsub.f32 %v288, %v433
        %v466 = vsub.f32 %v289, %v434
        %v467 = vsub.f32 %v290, %v435
        %v468 = vsub.f32 %v291, %v436
        %v469 = vsub.f32 %v292, %v433
        %v470 = vsub.f32 %v293, %v434
        %v471 = vsub.f32 %v294, %v435
        %v472 = vsub.f32 %v295, %v436
        %v473 = vsub.f32 %v296, %v437
        %v474 = vsub.f32 %v297, %v438
        %v475 = vsub.f32 %v298, %v439
        %v476 = vsub.f32 %v299, %v440
        %v477 = vsub.f32 %v300, %v437
        %v478 = vsub.f32 %v301, %v438
        %v479 = vsub.f32 %v302, %v439
        %v480 = vsub.f32 %v303, %v440
        %v481 = vsub.f32 %v304, %v437
        %v482 = vsub.f32 %v305, %v438
        %v483 = vsub.f32 %v306, %v439
        %v484 = vsub.f32 %v307, %v440
        %v485 = vsub.f32 %v308, %v437
        %v486 = vsub.f32 %v309, %v438
        %v487 = vsub.f32 %v310, %v439
        %v488 = vsub.f32 %v311, %v440
        %v489 = vsub.f32 %v312, %v437
        %v490 = vsub.f32 %v313, %v438
        %v491 = vsub.f32 %v314, %v439
        %v492 = vsub.f32 %v315, %v440
        %v493 = vsub.f32 %v316, %v437
        %v494 = vsub.f32 %v317, %v438
        %v495 = vsub.f32 %v318, %v439
        %v496 = vsub.f32 %v319, %v440
        %v497 = vsub.f32 %v320, %v437
        %v498 = vsub.f32 %v321, %v438
        %v499 = vsub.f32 %v322, %v439
        %v500 = vsub.f32 %v323, %v440
        %v501 = vsub.f32 %v324, %v437
        %v502 = vsub.f32 %v325, %v438
        %v503 = vsub.f32 %v326, %v439
        %v504 = vsub.f32 %v327, %v440
        %v505 = vmul.f32 %v441, %v441
        %v506 = vmul.f32 %v442, %v442
        %v507 = vmul.f32 %v443, %v443
        %v508 = vmul.f32 %v444, %v444
        %v509 = vmul.f32 %v445, %v445
        %v510 = vmul.f32 %v446, %v446
        %v511 = vmul.f32 %v447, %v447
        %v512 = vmul.f32 %v448, %v448
        %v513 = vmul.f32 %v449, %v449
        %v514 = vmul.f32 %v450, %v450
        %v515 = vmul.f32 %v451, %v451
        %v516 = vmul.f32 %v452, %v452
        %v517 = vmul.f32 %v453, %v453
        %v518 = vmul.f32 %v454, %v454
        %v519 = vmul.f32 %v455, %v455
        %v520 = vmul.f32 %v456, %v456
        %v521 = vmul.f32 %v457, %v457
        %v522 = vmul.f32 %v458, %v458
        %v523 = vmul.f32 %v459, %v459
        %v524 = vmul.f32 %v460, %v460
        %v525 = vmul.f32 %v461, %v461
        %v526 = vmul.f32 %v462, %v462
        %v527 = vmul.f32 %v463, %v463
        %v528 = vmul.f32 %v464, %v464
        %v529 = vmul.f32 %v465, %v465
        %v530 = vmul.f32 %v466, %v466
        %v531 = vmul.f32 %v467, %v467
        %v532 = vmul.f32 %v468, %v468
        %v533 = vmul.f32 %v469, %v469
        %v534 = vmul.f32 %v470, %v470
        %v535 = vmul.f32 %v471, %v471
        %v536 = vmul.f32 %v472, %v472
        %v537 = vmul.f32 %v473, %v473
        %v538 = vmul.f32 %v474, %v474
        %v539 = vmul.f32 %v475, %v475
        %v540 = vmul.f32 %v476, %v476
        %v541 = vmul.f32 %v477, %v477
        %v542 = vmul.f32 %v478, %v478
        %v543 = vmul.f32 %v479, %v479
        %v544 = vmul.f32 %v480, %v480
        %v545 = vmul.f32 %v481, %v481
        %v546 = vmul.f32 %v482, %v482
        %v547 = vmul.f32 %v483, %v483
        %v548 = vmul.f32 %v484, %v484
        %v549 = vmul.f32 %v485, %v485
        %v550 = vmul.f32 %v486, %v486
        %v551 = vmul.f32 %v487, %v487
        %v552 = vmul.f32 %v488, %v488
        %v553 = vmul.f32 %v489, %v489
        %v554 = vmul.f32 %v490, %v490
        %v555 = vmul.f32 %v491, %v491
        %v556 = vmul.f32 %v492, %v492
        %v557 = vmul.f32 %v493, %v493
        %v558 = vmul.f32 %v494, %v494
        %v559 = vmul.f32 %v495, %v495
        %v560 = vmul.f32 %v496, %v496
        %v561 = vmul.f32 %v497, %v497
        %v562 = vmul.f32 %v498, %v498
        %v563 = vmul.f32 %v499, %v499
        %v564 = vmul.f32 %v500, %v500
        %v565 = vmul.f32 %v501, %v501
        %v566 = vmul.f32 %v502, %v502
        %v567 = vmul.f32 %v503, %v503
        %v568 = vmul.f32 %v504, %v504
        %v569 = vadd.f32 %v505, %v509
        %v570 = vadd.f32 %v569, %v513
        %v571 = vadd.f32 %v570, %v517
        %v572 = vadd.f32 %v571, %v521
        %v573 = vadd.f32 %v572, %v525
        %v574 = vadd.f32 %v573, %v529
        %v575 = vadd.f32 %v574, %v533
        %v576 = vrot.slane %v575, 4
        %v577 = vadd.f32 %v575, %v576
        %v578 = vrot.slane %v577, 2
        %v579 = vadd.f32 %v577, %v578
        %v580 = vrot.slane %v579, 1
        %v581 = vadd.f32 %v579, %v580
        %v582 = vadd.f32 %v506, %v510
        %v583 = vadd.f32 %v582, %v514
        %v584 = vadd.f32 %v583, %v518
        %v585 = vadd.f32 %v584, %v522
        %v586 = vadd.f32 %v585, %v526
        %v587 = vadd.f32 %v586, %v530
        %v588 = vadd.f32 %v587, %v534
        %v589 = vrot.slane %v588, 4
        %v590 = vadd.f32 %v588, %v589
        %v591 = vrot.slane %v590, 2
        %v592 = vadd.f32 %v590, %v591
        %v593 = vrot.slane %v592, 1
        %v594 = vadd.f32 %v592, %v593
        %v595 = vadd.f32 %v507, %v511
        %v596 = vadd.f32 %v595, %v515
        %v597 = vadd.f32 %v596, %v519
        %v598 = vadd.f32 %v597, %v523
        %v599 = vadd.f32 %v598, %v527
        %v600 = vadd.f32 %v599, %v531
        %v601 = vadd.f32 %v600, %v535
        %v602 = vrot.slane %v601, 4
        %v603 = vadd.f32 %v601, %v602
        %v604 = vrot.slane %v603, 2
        %v605 = vadd.f32 %v603, %v604
        %v606 = vrot.slane %v605, 1
        %v607 = vadd.f32 %v605, %v606
        %v608 = vadd.f32 %v508, %v512
        %v609 = vadd.f32 %v608, %v516
        %v610 = vadd.f32 %v609, %v520
        %v611 = vadd.f32 %v610, %v524
        %v612 = vadd.f32 %v611, %v528
        %v613 = vadd.f32 %v612, %v532
        %v614 = vadd.f32 %v613, %v536
        %v615 = vrot.slane %v614, 4
        %v616 = vadd.f32 %v614, %v615
        %v617 = vrot.slane %v616, 2
        %v618 = vadd.f32 %v616, %v617
        %v619 = vrot.slane %v618, 1
        %v620 = vadd.f32 %v618, %v619
        %v621 = vadd.f32 %v537, %v541
        %v622 = vadd.f32 %v621, %v545
        %v623 = vadd.f32 %v622, %v549
        %v624 = vadd.f32 %v623, %v553
        %v625 = vadd.f32 %v624, %v557
        %v626 = vadd.f32 %v625, %v561
        %v627 = vadd.f32 %v626, %v565
        %v628 = vrot.slane %v627, 4
        %v629 = vadd.f32 %v627, %v628
        %v630 = vrot.slane %v629, 2
        %v631 = vadd.f32 %v629, %v630
        %v632 = vrot.slane %v631, 1
        %v633 = vadd.f32 %v631, %v632
        %v634 = vadd.f32 %v538, %v542
        %v635 = vadd.f32 %v634, %v546
        %v636 = vadd.f32 %v635, %v550
        %v637 = vadd.f32 %v636, %v554
        %v638 = vadd.f32 %v637, %v558
        %v639 = vadd.f32 %v638, %v562
        %v640 = vadd.f32 %v639, %v566
        %v641 = vrot.slane %v640, 4
        %v642 = vadd.f32 %v640, %v641
        %v643 = vrot.slane %v642, 2
        %v644 = vadd.f32 %v642, %v643
        %v645 = vrot.slane %v644, 1
        %v646 = vadd.f32 %v644, %v645
        %v647 = vadd.f32 %v539, %v543
        %v648 = vadd.f32 %v647, %v547
        %v649 = vadd.f32 %v648, %v551
        %v650 = vadd.f32 %v649, %v555
        %v651 = vadd.f32 %v650, %v559
        %v652 = vadd.f32 %v651, %v563
        %v653 = vadd.f32 %v652, %v567
        %v654 = vrot.slane %v653, 4
        %v655 = vadd.f32 %v653, %v654
        %v656 = vrot.slane %v655, 2
        %v657 = vadd.f32 %v655, %v656
        %v658 = vrot.slane %v657, 1
        %v659 = vadd.f32 %v657, %v658
        %v660 = vadd.f32 %v540, %v544
        %v661 = vadd.f32 %v660, %v548
        %v662 = vadd.f32 %v661, %v552
        %v663 = vadd.f32 %v662, %v556
        %v664 = vadd.f32 %v663, %v560
        %v665 = vadd.f32 %v664, %v564
        %v666 = vadd.f32 %v665, %v568
        %v667 = vrot.slane %v666, 4
        %v668 = vadd.f32 %v666, %v667
        %v669 = vrot.slane %v668, 2
        %v670 = vadd.f32 %v668, %v669
        %v671 = vrot.slane %v670, 1
        %v672 = vadd.f32 %v670, %v671
        %v673 = vmul.f32 %v581, %v432
        %v674 = vmul.f32 %v594, %v432
        %v675 = vmul.f32 %v607, %v432
        %v676 = vmul.f32 %v620, %v432
        %v677 = vmul.f32 %v633, %v432
        %v678 = vmul.f32 %v646, %v432
        %v679 = vmul.f32 %v659, %v432
        %v680 = vmul.f32 %v672, %v432
        %v681 = vrsqrt.pop %v673
        %v682 = vmul.f32 %v673, %v681
        %vm683 = vcmp.eq.f32.partialorder %v673, inf
        %v684 = vsel %vm683, %v673, %v682
        %vm685 = vcmp.eq.f32.partialorder %v673, 0.0
        %v686 = vand.u32 %v673, 2147483648
        %v687 = vsel %vm685, %v686, %v684
        %v688 = vrsqrt.pop %v674
        %v689 = vmul.f32 %v674, %v688
        %vm690 = vcmp.eq.f32.partialorder %v674, inf
        %v691 = vsel %vm690, %v674, %v689
        %vm692 = vcmp.eq.f32.partialorder %v674, 0.0
        %v693 = vand.u32 %v674, 2147483648
        %v694 = vsel %vm692, %v693, %v691
        %v695 = vrsqrt.pop %v675
        %v696 = vmul.f32 %v675, %v695
        %vm697 = vcmp.eq.f32.partialorder %v675, inf
        %v698 = vsel %vm697, %v675, %v696
        %vm699 = vcmp.eq.f32.partialorder %v675, 0.0
        %v700 = vand.u32 %v675, 2147483648
        %v701 = vsel %vm699, %v700, %v698
        %v702 = vrsqrt.pop %v676
        %v703 = vmul.f32 %v676, %v702
        %vm704 = vcmp.eq.f32.partialorder %v676, inf
        %v705 = vsel %vm704, %v676, %v703
        %vm706 = vcmp.eq.f32.partialorder %v676, 0.0
        %v707 = vand.u32 %v676, 2147483648
        %v708 = vsel %vm706, %v707, %v705
        %v709 = vrsqrt.pop %v677
        %v710 = vmul.f32 %v677, %v709
        %vm711 = vcmp.eq.f32.partialorder %v677, inf
        %v712 = vsel %vm711, %v677, %v710
        %vm713 = vcmp.eq.f32.partialorder %v677, 0.0
        %v714 = vand.u32 %v677, 2147483648
        %v715 = vsel %vm713, %v714, %v712
        %v716 = vrsqrt.pop %v678
        %v717 = vmul.f32 %v678, %v716
        %vm718 = vcmp.eq.f32.partialorder %v678, inf
        %v719 = vsel %vm718, %v678, %v717
        %vm720 = vcmp.eq.f32.partialorder %v678, 0.0
        %v721 = vand.u32 %v678, 2147483648
        %v722 = vsel %vm720, %v721, %v719
        %v723 = vrsqrt.pop %v679
        %v724 = vmul.f32 %v679, %v723
        %vm725 = vcmp.eq.f32.partialorder %v679, inf
        %v726 = vsel %vm725, %v679, %v724
        %vm727 = vcmp.eq.f32.partialorder %v679, 0.0
        %v728 = vand.u32 %v679, 2147483648
        %v729 = vsel %vm727, %v728, %v726
        %v730 = vrsqrt.pop %v680
        %v731 = vmul.f32 %v680, %v730
        %vm732 = vcmp.eq.f32.partialorder %v680, inf
        %v733 = vsel %vm732, %v680, %v731
        %vm734 = vcmp.eq.f32.partialorder %v680, 0.0
        %v735 = vand.u32 %v680, 2147483648
        %v736 = vsel %vm734, %v735, %v733
        %v737 = vadd.f32 %v687, 1e-05
        %v738 = vadd.f32 %v694, 1e-05
        %v739 = vadd.f32 %v701, 1e-05
        %v740 = vadd.f32 %v708, 1e-05
        %v741 = vadd.f32 %v715, 1e-05
        %v742 = vadd.f32 %v722, 1e-05
        %v743 = vadd.f32 %v729, 1e-05
        %v744 = vadd.f32 %v736, 1e-05
        %v745 = vrcp.pop %v737
        %v746 = vrcp.pop %v738
        %v747 = vrcp.pop %v739
        %v748 = vrcp.pop %v740
        %v749 = vrcp.pop %v741
        %v750 = vrcp.pop %v742
        %v751 = vrcp.pop %v743
        %v752 = vrcp.pop %v744
        %v753 = vmul.f32 %v441, %v745
        %v754 = vmul.f32 %v442, %v746
        %v755 = vmul.f32 %v443, %v747
        %v756 = vmul.f32 %v444, %v748
        %v757 = vmul.f32 %v445, %v745
        %v758 = vmul.f32 %v446, %v746
        %v759 = vmul.f32 %v447, %v747
        %v760 = vmul.f32 %v448, %v748
        %v761 = vmul.f32 %v449, %v745
        %v762 = vmul.f32 %v450, %v746
        %v763 = vmul.f32 %v451, %v747
        %v764 = vmul.f32 %v452, %v748
        %v765 = vmul.f32 %v453, %v745
        %v766 = vmul.f32 %v454, %v746
        %v767 = vmul.f32 %v455, %v747
        %v768 = vmul.f32 %v456, %v748
        %v769 = vmul.f32 %v457, %v745
        %v770 = vmul.f32 %v458, %v746
        %v771 = vmul.f32 %v459, %v747
        %v772 = vmul.f32 %v460, %v748
        %v773 = vmul.f32 %v461, %v745
        %v774 = vmul.f32 %v462, %v746
        %v775 = vmul.f32 %v463, %v747
        %v776 = vmul.f32 %v464, %v748
        %v777 = vmul.f32 %v465, %v745
        %v778 = vmul.f32 %v466, %v746
        %v779 = vmul.f32 %v467, %v747
        %v780 = vmul.f32 %v468, %v748
        %v781 = vmul.f32 %v469, %v745
        %v782 = vmul.f32 %v470, %v746
        %v783 = vmul.f32 %v471, %v747
        %v784 = vmul.f32 %v472, %v748
        %v785 = vmul.f32 %v473, %v749
        %v786 = vmul.f32 %v474, %v750
        %v787 = vmul.f32 %v475, %v751
        %v788 = vmul.f32 %v476, %v752
        %v789 = vmul.f32 %v477, %v749
        %v790 = vmul.f32 %v478, %v750
        %v791 = vmul.f32 %v479, %v751
        %v792 = vmul.f32 %v480, %v752
        %v793 = vmul.f32 %v481, %v749
        %v794 = vmul.f32 %v482, %v750
        %v795 = vmul.f32 %v483, %v751
        %v796 = vmul.f32 %v484, %v752
        %v797 = vmul.f32 %v485, %v749
        %v798 = vmul.f32 %v486, %v750
        %v799 = vmul.f32 %v487, %v751
        %v800 = vmul.f32 %v488, %v752
        %v801 = vmul.f32 %v489, %v749
        %v802 = vmul.f32 %v490, %v750
        %v803 = vmul.f32 %v491, %v751
        %v804 = vmul.f32 %v492, %v752
        %v805 = vmul.f32 %v493, %v749
        %v806 = vmul.f32 %v494, %v750
        %v807 = vmul.f32 %v495, %v751
        %v808 = vmul.f32 %v496, %v752
        %v809 = vmul.f32 %v497, %v749
        %v810 = vmul.f32 %v498, %v750
        %v811 = vmul.f32 %v499, %v751
        %v812 = vmul.f32 %v500, %v752
        %v813 = vmul.f32 %v501, %v749
        %v814 = vmul.f32 %v502, %v750
        %v815 = vmul.f32 %v503, %v751
        %v816 = vmul.f32 %v504, %v752
        %v817 = vld [vmem:[%s1] sm:$0xff]
        %v818 = vld [vmem:[%s1 + $0x8] sm:$0xff]
        %v819 = vld [vmem:[%s1 + $0x10] sm:$0xff]
        %v820 = vld [vmem:[%s1 + $0x18] sm:$0xff]
        %v821 = vld [vmem:[%s1 + $0x20] sm:$0xff]
        %v822 = vld [vmem:[%s1 + $0x28] sm:$0xff]
        %v823 = vld [vmem:[%s1 + $0x30] sm:$0xff]
        %v824 = vld [vmem:[%s1 + $0x38] sm:$0xff]
        %v825 = vld [vmem:[%s1 + $0x40] sm:$0xff]
        %v826 = vld [vmem:[%s1 + $0x48] sm:$0xff]
        %v827 = vld [vmem:[%s1 + $0x50] sm:$0xff]
        %v828 = vld [vmem:[%s1 + $0x58] sm:$0xff]
        %v829 = vld [vmem:[%s1 + $0x60] sm:$0xff]
        %v830 = vld [vmem:[%s1 + $0x68] sm:$0xff]
        %v831 = vld [vmem:[%s1 + $0x70] sm:$0xff]
        %v832 = vld [vmem:[%s1 + $0x78] sm:$0xff]
        %834 = vset.pattern.permute.xlu0 0
        %835 = vperm.xlu0 %834, %v817
        %v836 = vpop.permute.xlu0 %835
        %839 = vset.pattern.permute.xlu0 0
        %840 = vperm.xlu0 %839, %v818
        %v841 = vpop.permute.xlu0 %840
        %844 = vset.pattern.permute.xlu0 0
        %845 = vperm.xlu0 %844, %v819
        %v846 = vpop.permute.xlu0 %845
        %849 = vset.pattern.permute.xlu0 0
        %850 = vperm.xlu0 %849, %v820
        %v851 = vpop.permute.xlu0 %850
        %854 = vset.pattern.permute.xlu0 0
        %855 = vperm.xlu0 %854, %v821
        %v856 = vpop.permute.xlu0 %855
        %859 = vset.pattern.permute.xlu0 0
        %860 = vperm.xlu0 %859, %v822
        %v861 = vpop.permute.xlu0 %860
        %864 = vset.pattern.permute.xlu0 0
        %865 = vperm.xlu0 %864, %v823
        %v866 = vpop.permute.xlu0 %865
        %869 = vset.pattern.permute.xlu0 0
        %870 = vperm.xlu0 %869, %v824
        %v871 = vpop.permute.xlu0 %870
        %874 = vset.pattern.permute.xlu0 0
        %875 = vperm.xlu0 %874, %v825
        %v876 = vpop.permute.xlu0 %875
        %879 = vset.pattern.permute.xlu0 0
        %880 = vperm.xlu0 %879, %v826
        %v881 = vpop.permute.xlu0 %880
        %884 = vset.pattern.permute.xlu0 0
        %885 = vperm.xlu0 %884, %v827
        %v886 = vpop.permute.xlu0 %885
        %889 = vset.pattern.permute.xlu0 0
        %890 = vperm.xlu0 %889, %v828
        %v891 = vpop.permute.xlu0 %890
        %894 = vset.pattern.permute.xlu0 0
        %895 = vperm.xlu0 %894, %v829
        %v896 = vpop.permute.xlu0 %895
        %899 = vset.pattern.permute.xlu0 0
        %900 = vperm.xlu0 %899, %v830
        %v901 = vpop.permute.xlu0 %900
        %904 = vset.pattern.permute.xlu0 0
        %905 = vperm.xlu0 %904, %v831
        %v906 = vpop.permute.xlu0 %905
        %909 = vset.pattern.permute.xlu0 0
        %910 = vperm.xlu0 %909, %v832
        %v911 = vpop.permute.xlu0 %910
        %v913 = vmul.f32 %v753, %v836
        %v914 = vmul.f32 %v754, %v836
        %v915 = vmul.f32 %v755, %v836
        %v916 = vmul.f32 %v756, %v836
        %v917 = vmul.f32 %v757, %v841
        %v918 = vmul.f32 %v758, %v841
        %v919 = vmul.f32 %v759, %v841
        %v920 = vmul.f32 %v760, %v841
        %v921 = vmul.f32 %v761, %v846
        %v922 = vmul.f32 %v762, %v846
        %v923 = vmul.f32 %v763, %v846
        %v924 = vmul.f32 %v764, %v846
        %v925 = vmul.f32 %v765, %v851
        %v926 = vmul.f32 %v766, %v851
        %v927 = vmul.f32 %v767, %v851
        %v928 = vmul.f32 %v768, %v851
        %v929 = vmul.f32 %v769, %v856
        %v930 = vmul.f32 %v770, %v856
        %v931 = vmul.f32 %v771, %v856
        %v932 = vmul.f32 %v772, %v856
        %v933 = vmul.f32 %v773, %v861
        %v934 = vmul.f32 %v774, %v861
        %v935 = vmul.f32 %v775, %v861
        %v936 = vmul.f32 %v776, %v861
        %v937 = vmul.f32 %v777, %v866
        %v938 = vmul.f32 %v778, %v866
        %v939 = vmul.f32 %v779, %v866
        %v940 = vmul.f32 %v780, %v866
        %v941 = vmul.f32 %v781, %v871
        %v942 = vmul.f32 %v782, %v871
        %v943 = vmul.f32 %v783, %v871
        %v944 = vmul.f32 %v784, %v871
        %v945 = vmul.f32 %v785, %v876
        %v946 = vmul.f32 %v786, %v876
        %v947 = vmul.f32 %v787, %v876
        %v948 = vmul.f32 %v788, %v876
        %v949 = vmul.f32 %v789, %v881
        %v950 = vmul.f32 %v790, %v881
        %v951 = vmul.f32 %v791, %v881
        %v952 = vmul.f32 %v792, %v881
        %v953 = vmul.f32 %v793, %v886
        %v954 = vmul.f32 %v794, %v886
        %v955 = vmul.f32 %v795, %v886
        %v956 = vmul.f32 %v796, %v886
        %v957 = vmul.f32 %v797, %v891
        %v958 = vmul.f32 %v798, %v891
        %v959 = vmul.f32 %v799, %v891
        %v960 = vmul.f32 %v800, %v891
        %v961 = vmul.f32 %v801, %v896
        %v962 = vmul.f32 %v802, %v896
        %v963 = vmul.f32 %v803, %v896
        %v964 = vmul.f32 %v804, %v896
        %v965 = vmul.f32 %v805, %v901
        %v966 = vmul.f32 %v806, %v901
        %v967 = vmul.f32 %v807, %v901
        %v968 = vmul.f32 %v808, %v901
        %v969 = vmul.f32 %v809, %v906
        %v970 = vmul.f32 %v810, %v906
        %v971 = vmul.f32 %v811, %v906
        %v972 = vmul.f32 %v812, %v906
        %v973 = vmul.f32 %v813, %v911
        %v974 = vmul.f32 %v814, %v911
        %v975 = vmul.f32 %v815, %v911
        %v976 = vmul.f32 %v816, %v911
        %v977 = vld [vmem:[%s2] sm:$0xff]
        %v978 = vld [vmem:[%s2 + $0x8] sm:$0xff]
        %v979 = vld [vmem:[%s2 + $0x10] sm:$0xff]
        %v980 = vld [vmem:[%s2 + $0x18] sm:$0xff]
        %v981 = vld [vmem:[%s2 + $0x20] sm:$0xff]
        %v982 = vld [vmem:[%s2 + $0x28] sm:$0xff]
        %v983 = vld [vmem:[%s2 + $0x30] sm:$0xff]
        %v984 = vld [vmem:[%s2 + $0x38] sm:$0xff]
        %v985 = vld [vmem:[%s2 + $0x40] sm:$0xff]
        %v986 = vld [vmem:[%s2 + $0x48] sm:$0xff]
        %v987 = vld [vmem:[%s2 + $0x50] sm:$0xff]
        %v988 = vld [vmem:[%s2 + $0x58] sm:$0xff]
        %v989 = vld [vmem:[%s2 + $0x60] sm:$0xff]
        %v990 = vld [vmem:[%s2 + $0x68] sm:$0xff]
        %v991 = vld [vmem:[%s2 + $0x70] sm:$0xff]
        %v992 = vld [vmem:[%s2 + $0x78] sm:$0xff]
        %994 = vset.pattern.permute.xlu0 0
        %995 = vperm.xlu0 %994, %v977
        %v996 = vpop.permute.xlu0 %995
        %999 = vset.pattern.permute.xlu0 0
        %1000 = vperm.xlu0 %999, %v978
        %v1001 = vpop.permute.xlu0 %1000
        %1004 = vset.pattern.permute.xlu0 0
        %1005 = vperm.xlu0 %1004, %v979
        %v1006 = vpop.permute.xlu0 %1005
        %1009 = vset.pattern.permute.xlu0 0
        %1010 = vperm.xlu0 %1009, %v980
        %v1011 = vpop.permute.xlu0 %1010
        %1014 = vset.pattern.permute.xlu0 0
        %1015 = vperm.xlu0 %1014, %v981
        %v1016 = vpop.permute.xlu0 %1015
        %1019 = vset.pattern.permute.xlu0 0
        %1020 = vperm.xlu0 %1019, %v982
        %v1021 = vpop.permute.xlu0 %1020
        %1024 = vset.pattern.permute.xlu0 0
        %1025 = vperm.xlu0 %1024, %v983
        %v1026 = vpop.permute.xlu0 %1025
        %1029 = vset.pattern.permute.xlu0 0
        %1030 = vperm.xlu0 %1029, %v984
        %v1031 = vpop.permute.xlu0 %1030
        %1034 = vset.pattern.permute.xlu0 0
        %1035 = vperm.xlu0 %1034, %v985
        %v1036 = vpop.permute.xlu0 %1035
        %1039 = vset.pattern.permute.xlu0 0
        %1040 = vperm.xlu0 %1039, %v986
        %v1041 = vpop.permute.xlu0 %1040
        %1044 = vset.pattern.permute.xlu0 0
        %1045 = vperm.xlu0 %1044, %v987
        %v1046 = vpop.permute.xlu0 %1045
        %1049 = vset.pattern.permute.xlu0 0
        %1050 = vperm.xlu0 %1049, %v988
        %v1051 = vpop.permute.xlu0 %1050
        %1054 = vset.pattern.permute.xlu0 0
        %1055 = vperm.xlu0 %1054, %v989
        %v1056 = vpop.permute.xlu0 %1055
        %1059 = vset.pattern.permute.xlu0 0
        %1060 = vperm.xlu0 %1059, %v990
        %v1061 = vpop.permute.xlu0 %1060
        %1064 = vset.pattern.permute.xlu0 0
        %1065 = vperm.xlu0 %1064, %v991
        %v1066 = vpop.permute.xlu0 %1065
        %1069 = vset.pattern.permute.xlu0 0
        %1070 = vperm.xlu0 %1069, %v992
        %v1071 = vpop.permute.xlu0 %1070
        %v1073 = vadd.f32 %v913, %v996
        %v1074 = vadd.f32 %v914, %v996
        %v1075 = vadd.f32 %v915, %v996
        %v1076 = vadd.f32 %v916, %v996
        %v1077 = vadd.f32 %v917, %v1001
        %v1078 = vadd.f32 %v918, %v1001
        %v1079 = vadd.f32 %v919, %v1001
        %v1080 = vadd.f32 %v920, %v1001
        %v1081 = vadd.f32 %v921, %v1006
        %v1082 = vadd.f32 %v922, %v1006
        %v1083 = vadd.f32 %v923, %v1006
        %v1084 = vadd.f32 %v924, %v1006
        %v1085 = vadd.f32 %v925, %v1011
        %v1086 = vadd.f32 %v926, %v1011
        %v1087 = vadd.f32 %v927, %v1011
        %v1088 = vadd.f32 %v928, %v1011
        %v1089 = vadd.f32 %v929, %v1016
        %v1090 = vadd.f32 %v930, %v1016
        %v1091 = vadd.f32 %v931, %v1016
        %v1092 = vadd.f32 %v932, %v1016
        %v1093 = vadd.f32 %v933, %v1021
        %v1094 = vadd.f32 %v934, %v1021
        %v1095 = vadd.f32 %v935, %v1021
        %v1096 = vadd.f32 %v936, %v1021
        %v1097 = vadd.f32 %v937, %v1026
        %v1098 = vadd.f32 %v938, %v1026
        %v1099 = vadd.f32 %v939, %v1026
        %v1100 = vadd.f32 %v940, %v1026
        %v1101 = vadd.f32 %v941, %v1031
        %v1102 = vadd.f32 %v942, %v1031
        %v1103 = vadd.f32 %v943, %v1031
        %v1104 = vadd.f32 %v944, %v1031
        %v1105 = vadd.f32 %v945, %v1036
        %v1106 = vadd.f32 %v946, %v1036
        %v1107 = vadd.f32 %v947, %v1036
        %v1108 = vadd.f32 %v948, %v1036
        %v1109 = vadd.f32 %v949, %v1041
        %v1110 = vadd.f32 %v950, %v1041
        %v1111 = vadd.f32 %v951, %v1041
        %v1112 = vadd.f32 %v952, %v1041
        %v1113 = vadd.f32 %v953, %v1046
        %v1114 = vadd.f32 %v954, %v1046
        %v1115 = vadd.f32 %v955, %v1046
        %v1116 = vadd.f32 %v956, %v1046
        %v1117 = vadd.f32 %v957, %v1051
        %v1118 = vadd.f32 %v958, %v1051
        %v1119 = vadd.f32 %v959, %v1051
        %v1120 = vadd.f32 %v960, %v1051
        %v1121 = vadd.f32 %v961, %v1056
        %v1122 = vadd.f32 %v962, %v1056
        %v1123 = vadd.f32 %v963, %v1056
        %v1124 = vadd.f32 %v964, %v1056
        %v1125 = vadd.f32 %v965, %v1061
        %v1126 = vadd.f32 %v966, %v1061
        %v1127 = vadd.f32 %v967, %v1061
        %v1128 = vadd.f32 %v968, %v1061
        %v1129 = vadd.f32 %v969, %v1066
        %v1130 = vadd.f32 %v970, %v1066
        %v1131 = vadd.f32 %v971, %v1066
        %v1132 = vadd.f32 %v972, %v1066
        %v1133 = vadd.f32 %v973, %v1071
        %v1134 = vadd.f32 %v974, %v1071
        %v1135 = vadd.f32 %v975, %v1071
        %v1136 = vadd.f32 %v976, %v1071
        %v1137 = vld [vmem:[%s3] sm:$0xf]
        %v1138 = vld [vmem:[%s3 + $0x4] sm:$0xf]
        %v1139 = vld [vmem:[%s3 + $0x8] sm:$0xf]
        %v1140 = vld [vmem:[%s3 + $0xc] sm:$0xf]
        %v1141 = vld [vmem:[%s3 + $0x10] sm:$0xf]
        %v1142 = vld [vmem:[%s3 + $0x14] sm:$0xf]
        %v1143 = vld [vmem:[%s3 + $0x18] sm:$0xf]
        %v1144 = vld [vmem:[%s3 + $0x1c] sm:$0xf]
        %v1145 = vld [vmem:[%s3 + $0x20] sm:$0xf]
        %v1146 = vld [vmem:[%s3 + $0x24] sm:$0xf]
        %v1147 = vld [vmem:[%s3 + $0x28] sm:$0xf]
        %v1148 = vld [vmem:[%s3 + $0x2c] sm:$0xf]
        %v1149 = vld [vmem:[%s3 + $0x30] sm:$0xf]
        %v1150 = vld [vmem:[%s3 + $0x34] sm:$0xf]
        %v1151 = vld [vmem:[%s3 + $0x38] sm:$0xf]
        %v1152 = vld [vmem:[%s3 + $0x3c] sm:$0xf]
        %v1153 = vpack.c.bf16 %v1077, %v1073
        %v1154 = vpack.c.bf16 %v1078, %v1074
        %v1155 = vpack.c.bf16 %v1079, %v1075
        %v1156 = vpack.c.bf16 %v1080, %v1076
        %v1157 = vpack.c.bf16 %v1085, %v1081
        %v1158 = vpack.c.bf16 %v1086, %v1082
        %v1159 = vpack.c.bf16 %v1087, %v1083
        %v1160 = vpack.c.bf16 %v1088, %v1084
        %v1161 = vpack.c.bf16 %v1093, %v1089
        %v1162 = vpack.c.bf16 %v1094, %v1090
        %v1163 = vpack.c.bf16 %v1095, %v1091
        %v1164 = vpack.c.bf16 %v1096, %v1092
        %v1165 = vpack.c.bf16 %v1101, %v1097
        %v1166 = vpack.c.bf16 %v1102, %v1098
        %v1167 = vpack.c.bf16 %v1103, %v1099
        %v1168 = vpack.c.bf16 %v1104, %v1100
        %v1169 = vpack.c.bf16 %v1109, %v1105
        %v1170 = vpack.c.bf16 %v1110, %v1106
        %v1171 = vpack.c.bf16 %v1111, %v1107
        %v1172 = vpack.c.bf16 %v1112, %v1108
        %v1173 = vpack.c.bf16 %v1117, %v1113
        %v1174 = vpack.c.bf16 %v1118, %v1114
        %v1175 = vpack.c.bf16 %v1119, %v1115
        %v1176 = vpack.c.bf16 %v1120, %v1116
        %v1177 = vpack.c.bf16 %v1125, %v1121
        %v1178 = vpack.c.bf16 %v1126, %v1122
        %v1179 = vpack.c.bf16 %v1127, %v1123
        %v1180 = vpack.c.bf16 %v1128, %v1124
        %v1181 = vpack.c.bf16 %v1133, %v1129
        %v1182 = vpack.c.bf16 %v1134, %v1130
        %v1183 = vpack.c.bf16 %v1135, %v1131
        %v1184 = vpack.c.bf16 %v1136, %v1132
        %v1185 = vld [vmem:[%s4] sm:$0xff]
        %v1186 = vld [vmem:[%s4 + $0x8] sm:$0xff]
        %v1187 = vld [vmem:[%s4 + $0x10] sm:$0xff]
        %v1188 = vld [vmem:[%s4 + $0x18] sm:$0xff]
        %v1189 = vld [vmem:[%s4 + $0x20] sm:$0xff]
        %v1190 = vld [vmem:[%s4 + $0x28] sm:$0xff]
        %v1191 = vld [vmem:[%s4 + $0x30] sm:$0xff]
        %v1192 = vld [vmem:[%s4 + $0x38] sm:$0xff]
        %v1193 = vld [vmem:[%s4 + $0x40] sm:$0xff]
        %v1194 = vld [vmem:[%s4 + $0x48] sm:$0xff]
        %v1195 = vld [vmem:[%s4 + $0x50] sm:$0xff]
        %v1196 = vld [vmem:[%s4 + $0x58] sm:$0xff]
        %v1197 = vld [vmem:[%s4 + $0x60] sm:$0xff]
        %v1198 = vld [vmem:[%s4 + $0x68] sm:$0xff]
        %v1199 = vld [vmem:[%s4 + $0x70] sm:$0xff]
        %v1200 = vld [vmem:[%s4 + $0x78] sm:$0xff]
        %1202 = vset.pattern.permute.xlu0 0
        %1203 = vperm.xlu0 %1202, %v1185
        %v1204 = vpop.permute.xlu0 %1203
        %1207 = vset.pattern.permute.xlu0 0
        %1208 = vperm.xlu0 %1207, %v1186
        %v1209 = vpop.permute.xlu0 %1208
        %1212 = vset.pattern.permute.xlu0 0
        %1213 = vperm.xlu0 %1212, %v1187
        %v1214 = vpop.permute.xlu0 %1213
        %1217 = vset.pattern.permute.xlu0 0
        %1218 = vperm.xlu0 %1217, %v1188
        %v1219 = vpop.permute.xlu0 %1218
        %1222 = vset.pattern.permute.xlu0 0
        %1223 = vperm.xlu0 %1222, %v1189
        %v1224 = vpop.permute.xlu0 %1223
        %1227 = vset.pattern.permute.xlu0 0
        %1228 = vperm.xlu0 %1227, %v1190
        %v1229 = vpop.permute.xlu0 %1228
        %1232 = vset.pattern.permute.xlu0 0
        %1233 = vperm.xlu0 %1232, %v1191
        %v1234 = vpop.permute.xlu0 %1233
        %1237 = vset.pattern.permute.xlu0 0
        %1238 = vperm.xlu0 %1237, %v1192
        %v1239 = vpop.permute.xlu0 %1238
        %1242 = vset.pattern.permute.xlu0 0
        %1243 = vperm.xlu0 %1242, %v1193
        %v1244 = vpop.permute.xlu0 %1243
        %1247 = vset.pattern.permute.xlu0 0
        %1248 = vperm.xlu0 %1247, %v1194
        %v1249 = vpop.permute.xlu0 %1248
        %1252 = vset.pattern.permute.xlu0 0
        %1253 = vperm.xlu0 %1252, %v1195
        %v1254 = vpop.permute.xlu0 %1253
        %1257 = vset.pattern.permute.xlu0 0
        %1258 = vperm.xlu0 %1257, %v1196
        %v1259 = vpop.permute.xlu0 %1258
        %1262 = vset.pattern.permute.xlu0 0
        %1263 = vperm.xlu0 %1262, %v1197
        %v1264 = vpop.permute.xlu0 %1263
        %1267 = vset.pattern.permute.xlu0 0
        %1268 = vperm.xlu0 %1267, %v1198
        %v1269 = vpop.permute.xlu0 %1268
        %1272 = vset.pattern.permute.xlu0 0
        %1273 = vperm.xlu0 %1272, %v1199
        %v1274 = vpop.permute.xlu0 %1273
        %1277 = vset.pattern.permute.xlu0 0
        %1278 = vperm.xlu0 %1277, %v1200
        %v1279 = vpop.permute.xlu0 %1278
        %v1297 = vunpack.c.l.b16 %v1137
        %v1298 = vunpack.c.l.b16 %v1138
        %v1299 = vunpack.c.l.b16 %v1139
        %v1300 = vunpack.c.l.b16 %v1140
        %v1301 = vunpack.c.l.b16 %v1141
        %v1302 = vunpack.c.l.b16 %v1142
        %v1303 = vunpack.c.l.b16 %v1143
        %v1304 = vunpack.c.l.b16 %v1144
        %v1305 = vunpack.c.l.b16 %v1145
        %v1306 = vunpack.c.l.b16 %v1146
        %v1307 = vunpack.c.l.b16 %v1147
        %v1308 = vunpack.c.l.b16 %v1148
        %v1309 = vunpack.c.l.b16 %v1149
        %v1310 = vunpack.c.l.b16 %v1150
        %v1311 = vunpack.c.l.b16 %v1151
        %v1312 = vunpack.c.l.b16 %v1152
        %v1313 = vpack.c.b16 %v1298, %v1297
        %v1314 = vpack.c.b16 %v1300, %v1299
        %v1315 = vpack.c.b16 %v1302, %v1301
        %v1316 = vpack.c.b16 %v1304, %v1303
        %v1317 = vpack.c.b16 %v1306, %v1305
        %v1318 = vpack.c.b16 %v1308, %v1307
        %v1319 = vpack.c.b16 %v1310, %v1309
        %v1320 = vpack.c.b16 %v1312, %v1311
        %1329 = vmatprep.subr.bf16.mxu0 %v1154
        %1330 = vmatpush1.bf16.msra.mxu0 %v1153
        %1331 = vmatprep.subr.bf16.mxu0 %v1158
        %1332 = vmatpush1.bf16.msra.mxu0 %v1157
        %1333 = vmatprep.subr.bf16.mxu0 %v1162
        %1334 = vmatpush1.bf16.msra.mxu0 %v1161
        %1335 = vmatprep.subr.bf16.mxu0 %v1166
        %1336 = vmatpush1.bf16.msra.mxu0 %v1165
        %1337 = vmatprep.subr.bf16.mxu0 %v1170
        %1338 = vmatpush1.bf16.msra.mxu0 %v1169
        %1339 = vmatprep.subr.bf16.mxu0 %v1174
        %1340 = vmatpush1.bf16.msra.mxu0 %v1173
        %1341 = vmatprep.subr.bf16.mxu0 %v1178
        %1342 = vmatpush1.bf16.msra.mxu0 %v1177
        %1343 = vmatprep.subr.bf16.mxu0 %v1182
        %1344 = vmatpush1.bf16.msra.mxu0 %v1181
        %1345 = vmatprep.subr.bf16.mxu0 0
        %1346 = vmatpush1.bf16.msra.mxu0 0
        %1347 = vmatprep.subr.bf16.mxu0 0
        %1348 = vmatpush1.bf16.msra.mxu0 0
        %1349 = vmatprep.subr.bf16.mxu0 0
        %1350 = vmatpush1.bf16.msra.mxu0 0
        %1351 = vmatprep.subr.bf16.mxu0 0
        %1352 = vmatpush1.bf16.msra.mxu0 0
        %1353 = vmatprep.subr.bf16.mxu0 0
        %1354 = vmatpush1.bf16.msra.mxu0 0
        %1355 = vmatprep.subr.bf16.mxu0 0
        %1356 = vmatpush1.bf16.msra.mxu0 0
        %1357 = vmatprep.subr.bf16.mxu0 0
        %1358 = vmatpush1.bf16.msra.mxu0 0
        %1359 = vmatprep.subr.bf16.mxu0 0
        %1360 = vmatpush1.bf16.msra.mxu0 0
        %1361 = vmatprep.mubr.bf16.mxu0 0
        %1362 = vmatmul.mubr.bf16.gmra.mrb[0].mxu0 %v1313
        %v1363 = vpop.f32.mrb[0].mxu0
        %v1364 = vadd.f32 %v1204, %v1363
        %v1365 = vpop.f32.mrb[0].mxu0
        %v1366 = vadd.f32 %v1204, %v1365
        %v1367 = vpop.f32.mrb[0].mxu0
        %v1368 = vadd.f32 %v1209, %v1367
        %v1369 = vpop.f32.mrb[0].mxu0
        %v1370 = vadd.f32 %v1209, %v1369
        %1371 = vmatprep.mubr.bf16.mxu0 0
        %1372 = vmatmul.mubr.bf16.gmra.mrb[0].mxu0 %v1314
        %v1373 = vpop.f32.mrb[0].mxu0
        %v1374 = vadd.f32 %v1214, %v1373
        %v1375 = vpop.f32.mrb[0].mxu0
        %v1376 = vadd.f32 %v1214, %v1375
        %v1377 = vpop.f32.mrb[0].mxu0
        %v1378 = vadd.f32 %v1219, %v1377
        %v1379 = vpop.f32.mrb[0].mxu0
        %v1380 = vadd.f32 %v1219, %v1379
        %1381 = vmatprep.mubr.bf16.mxu0 0
        %1382 = vmatmul.mubr.bf16.gmra.mrb[0].mxu0 %v1315
        %v1383 = vpop.f32.mrb[0].mxu0
        %v1384 = vadd.f32 %v1224, %v1383
        %v1385 = vpop.f32.mrb[0].mxu0
        %v1386 = vadd.f32 %v1224, %v1385
        %v1387 = vpop.f32.mrb[0].mxu0
        %v1388 = vadd.f32 %v1229, %v1387
        %v1389 = vpop.f32.mrb[0].mxu0
        %v1390 = vadd.f32 %v1229, %v1389
        %1391 = vmatprep.mubr.bf16.mxu0 0
        %1392 = vmatmul.mubr.bf16.gmra.mrb[0].mxu0 %v1316
        %v1393 = vpop.f32.mrb[0].mxu0
        %v1394 = vadd.f32 %v1234, %v1393
        %v1395 = vpop.f32.mrb[0].mxu0
        %v1396 = vadd.f32 %v1234, %v1395
        %v1397 = vpop.f32.mrb[0].mxu0
        %v1398 = vadd.f32 %v1239, %v1397
        %v1399 = vpop.f32.mrb[0].mxu0
        %v1400 = vadd.f32 %v1239, %v1399
        %1401 = vmatprep.mubr.bf16.mxu0 0
        %1402 = vmatmul.mubr.bf16.gmra.mrb[0].mxu0 %v1317
        %v1403 = vpop.f32.mrb[0].mxu0
        %v1404 = vadd.f32 %v1244, %v1403
        %v1405 = vpop.f32.mrb[0].mxu0
        %v1406 = vadd.f32 %v1244, %v1405
        %v1407 = vpop.f32.mrb[0].mxu0
        %v1408 = vadd.f32 %v1249, %v1407
        %v1409 = vpop.f32.mrb[0].mxu0
        %v1410 = vadd.f32 %v1249, %v1409
        %1411 = vmatprep.mubr.bf16.mxu0 0
        %1412 = vmatmul.mubr.bf16.gmra.mrb[0].mxu0 %v1318
        %v1413 = vpop.f32.mrb[0].mxu0
        %v1414 = vadd.f32 %v1254, %v1413
        %v1415 = vpop.f32.mrb[0].mxu0
        %v1416 = vadd.f32 %v1254, %v1415
        %v1417 = vpop.f32.mrb[0].mxu0
        %v1418 = vadd.f32 %v1259, %v1417
        %v1419 = vpop.f32.mrb[0].mxu0
        %v1420 = vadd.f32 %v1259, %v1419
        %1421 = vmatprep.mubr.bf16.mxu0 0
        %1422 = vmatmul.mubr.bf16.gmra.mrb[0].mxu0 %v1319
        %v1423 = vpop.f32.mrb[0].mxu0
        %v1424 = vadd.f32 %v1264, %v1423
        %v1425 = vpop.f32.mrb[0].mxu0
        %v1426 = vadd.f32 %v1264, %v1425
        %v1427 = vpop.f32.mrb[0].mxu0
        %v1428 = vadd.f32 %v1269, %v1427
        %v1429 = vpop.f32.mrb[0].mxu0
        %v1430 = vadd.f32 %v1269, %v1429
        %1431 = vmatprep.mubr.bf16.mxu0 0
        %1432 = vmatmul.mubr.bf16.gmra.mrb[0].mxu0 %v1320
        %v1433 = vpop.f32.mrb[0].mxu0
        %v1434 = vadd.f32 %v1274, %v1433
        %v1435 = vpop.f32.mrb[0].mxu0
        %v1436 = vadd.f32 %v1274, %v1435
        %v1437 = vpop.f32.mrb[0].mxu0
        %v1438 = vadd.f32 %v1279, %v1437
        %v1439 = vpop.f32.mrb[0].mxu0
        %v1440 = vadd.f32 %v1279, %v1439
        %1441 = vdwg.mxu0
        %1442 = vmatprep.subr.bf16.mxu0 %v1156
        %1443 = vmatpush1.bf16.msra.mxu0 %v1155
        %1444 = vmatprep.subr.bf16.mxu0 %v1160
        %1445 = vmatpush1.bf16.msra.mxu0 %v1159
        %1446 = vmatprep.subr.bf16.mxu0 %v1164
        %1447 = vmatpush1.bf16.msra.mxu0 %v1163
        %1448 = vmatprep.subr.bf16.mxu0 %v1168
        %1449 = vmatpush1.bf16.msra.mxu0 %v1167
        %1450 = vmatprep.subr.bf16.mxu0 %v1172
        %1451 = vmatpush1.bf16.msra.mxu0 %v1171
        %1452 = vmatprep.subr.bf16.mxu0 %v1176
        %1453 = vmatpush1.bf16.msra.mxu0 %v1175
        %1454 = vmatprep.subr.bf16.mxu0 %v1180
        %1455 = vmatpush1.bf16.msra.mxu0 %v1179
        %1456 = vmatprep.subr.bf16.mxu0 %v1184
        %1457 = vmatpush1.bf16.msra.mxu0 %v1183
        %1458 = vmatprep.subr.bf16.mxu0 0
        %1459 = vmatpush1.bf16.msra.mxu0 0
        %1460 = vmatprep.subr.bf16.mxu0 0
        %1461 = vmatpush1.bf16.msra.mxu0 0
        %1462 = vmatprep.subr.bf16.mxu0 0
        %1463 = vmatpush1.bf16.msra.mxu0 0
        %1464 = vmatprep.subr.bf16.mxu0 0
        %1465 = vmatpush1.bf16.msra.mxu0 0
        %1466 = vmatprep.subr.bf16.mxu0 0
        %1467 = vmatpush1.bf16.msra.mxu0 0
        %1468 = vmatprep.subr.bf16.mxu0 0
        %1469 = vmatpush1.bf16.msra.mxu0 0
        %1470 = vmatprep.subr.bf16.mxu0 0
        %1471 = vmatpush1.bf16.msra.mxu0 0
        %1472 = vmatprep.subr.bf16.mxu0 0
        %1473 = vmatpush1.bf16.msra.mxu0 0
        %1474 = vmatprep.mubr.bf16.mxu0 0
        %1475 = vmatmul.mubr.bf16.gmra.mrb[0].mxu0 %v1313
        %v1476 = vpop.f32.mrb[0].mxu0
        %v1477 = vadd.f32 %v1204, %v1476
        %v1478 = vpop.f32.mrb[0].mxu0
        %v1479 = vadd.f32 %v1204, %v1478
        %v1480 = vpop.f32.mrb[0].mxu0
        %v1481 = vadd.f32 %v1209, %v1480
        %v1482 = vpop.f32.mrb[0].mxu0
        %v1483 = vadd.f32 %v1209, %v1482
        %1484 = vmatprep.mubr.bf16.mxu0 0
        %1485 = vmatmul.mubr.bf16.gmra.mrb[0].mxu0 %v1314
        %v1486 = vpop.f32.mrb[0].mxu0
        %v1487 = vadd.f32 %v1214, %v1486
        %v1488 = vpop.f32.mrb[0].mxu0
        %v1489 = vadd.f32 %v1214, %v1488
        %v1490 = vpop.f32.mrb[0].mxu0
        %v1491 = vadd.f32 %v1219, %v1490
        %v1492 = vpop.f32.mrb[0].mxu0
        %v1493 = vadd.f32 %v1219, %v1492
        %1494 = vmatprep.mubr.bf16.mxu0 0
        %1495 = vmatmul.mubr.bf16.gmra.mrb[0].mxu0 %v1315
        %v1496 = vpop.f32.mrb[0].mxu0
        %v1497 = vadd.f32 %v1224, %v1496
        %v1498 = vpop.f32.mrb[0].mxu0
        %v1499 = vadd.f32 %v1224, %v1498
        %v1500 = vpop.f32.mrb[0].mxu0
        %v1501 = vadd.f32 %v1229, %v1500
        %v1502 = vpop.f32.mrb[0].mxu0
        %v1503 = vadd.f32 %v1229, %v1502
        %1504 = vmatprep.mubr.bf16.mxu0 0
        %1505 = vmatmul.mubr.bf16.gmra.mrb[0].mxu0 %v1316
        %v1506 = vpop.f32.mrb[0].mxu0
        %v1507 = vadd.f32 %v1234, %v1506
        %v1508 = vpop.f32.mrb[0].mxu0
        %v1509 = vadd.f32 %v1234, %v1508
        %v1510 = vpop.f32.mrb[0].mxu0
        %v1511 = vadd.f32 %v1239, %v1510
        %v1512 = vpop.f32.mrb[0].mxu0
        %v1513 = vadd.f32 %v1239, %v1512
        %1514 = vmatprep.mubr.bf16.mxu0 0
        %1515 = vmatmul.mubr.bf16.gmra.mrb[0].mxu0 %v1317
        %v1516 = vpop.f32.mrb[0].mxu0
        %v1517 = vadd.f32 %v1244, %v1516
        %v1518 = vpop.f32.mrb[0].mxu0
        %v1519 = vadd.f32 %v1244, %v1518
        %v1520 = vpop.f32.mrb[0].mxu0
        %v1521 = vadd.f32 %v1249, %v1520
        %v1522 = vpop.f32.mrb[0].mxu0
        %v1523 = vadd.f32 %v1249, %v1522
        %1524 = vmatprep.mubr.bf16.mxu0 0
        %1525 = vmatmul.mubr.bf16.gmra.mrb[0].mxu0 %v1318
        %v1526 = vpop.f32.mrb[0].mxu0
        %v1527 = vadd.f32 %v1254, %v1526
        %v1528 = vpop.f32.mrb[0].mxu0
        %v1529 = vadd.f32 %v1254, %v1528
        %v1530 = vpop.f32.mrb[0].mxu0
        %v1531 = vadd.f32 %v1259, %v1530
        %v1532 = vpop.f32.mrb[0].mxu0
        %v1533 = vadd.f32 %v1259, %v1532
        %1534 = vmatprep.mubr.bf16.mxu0 0
        %1535 = vmatmul.mubr.bf16.gmra.mrb[0].mxu0 %v1319
        %v1536 = vpop.f32.mrb[0].mxu0
        %v1537 = vadd.f32 %v1264, %v1536
        %v1538 = vpop.f32.mrb[0].mxu0
        %v1539 = vadd.f32 %v1264, %v1538
        %v1540 = vpop.f32.mrb[0].mxu0
        %v1541 = vadd.f32 %v1269, %v1540
        %v1542 = vpop.f32.mrb[0].mxu0
        %v1543 = vadd.f32 %v1269, %v1542
        %1544 = vmatprep.mubr.bf16.mxu0 0
        %1545 = vmatmul.mubr.bf16.gmra.mrb[0].mxu0 %v1320
        %v1546 = vpop.f32.mrb[0].mxu0
        %v1547 = vadd.f32 %v1274, %v1546
        %v1548 = vpop.f32.mrb[0].mxu0
        %v1549 = vadd.f32 %v1274, %v1548
        %v1550 = vpop.f32.mrb[0].mxu0
        %v1551 = vadd.f32 %v1279, %v1550
        %v1552 = vpop.f32.mrb[0].mxu0
        %v1553 = vadd.f32 %v1279, %v1552
        %1554 = vdwg.mxu0
        %1555 = vst [vmem:[%s260] sm:$0xff] %v1364
        %1556 = vst [vmem:[%s260 + $0x8] sm:$0xff] %v1366
        %1557 = vst [vmem:[%s260 + $0x10] sm:$0xff] %v1477
        %1558 = vst [vmem:[%s260 + $0x18] sm:$0xff] %v1479
        %1559 = vst [vmem:[%s260 + $0x20] sm:$0xff] %v1368
        %1560 = vst [vmem:[%s260 + $0x28] sm:$0xff] %v1370
        %1561 = vst [vmem:[%s260 + $0x30] sm:$0xff] %v1481
        %1562 = vst [vmem:[%s260 + $0x38] sm:$0xff] %v1483
        %1563 = vst [vmem:[%s260 + $0x40] sm:$0xff] %v1374
        %1564 = vst [vmem:[%s260 + $0x48] sm:$0xff] %v1376
        %1565 = vst [vmem:[%s260 + $0x50] sm:$0xff] %v1487
        %1566 = vst [vmem:[%s260 + $0x58] sm:$0xff] %v1489
        %1567 = vst [vmem:[%s260 + $0x60] sm:$0xff] %v1378
        %1568 = vst [vmem:[%s260 + $0x68] sm:$0xff] %v1380
        %1569 = vst [vmem:[%s260 + $0x70] sm:$0xff] %v1491
        %1570 = vst [vmem:[%s260 + $0x78] sm:$0xff] %v1493
        %1571 = vst [vmem:[%s260 + $0x80] sm:$0xff] %v1384
        %1572 = vst [vmem:[%s260 + $0x88] sm:$0xff] %v1386
        %1573 = vst [vmem:[%s260 + $0x90] sm:$0xff] %v1497
        %1574 = vst [vmem:[%s260 + $0x98] sm:$0xff] %v1499
        %1575 = vst [vmem:[%s260 + $0xa0] sm:$0xff] %v1388
        %1576 = vst [vmem:[%s260 + $0xa8] sm:$0xff] %v1390
        %1577 = vst [vmem:[%s260 + $0xb0] sm:$0xff] %v1501
        %1578 = vst [vmem:[%s260 + $0xb8] sm:$0xff] %v1503
        %1579 = vst [vmem:[%s260 + $0xc0] sm:$0xff] %v1394
        %1580 = vst [vmem:[%s260 + $0xc8] sm:$0xff] %v1396
        %1581 = vst [vmem:[%s260 + $0xd0] sm:$0xff] %v1507
        %1582 = vst [vmem:[%s260 + $0xd8] sm:$0xff] %v1509
        %1583 = vst [vmem:[%s260 + $0xe0] sm:$0xff] %v1398
        %1584 = vst [vmem:[%s260 + $0xe8] sm:$0xff] %v1400
        %1585 = vst [vmem:[%s260 + $0xf0] sm:$0xff] %v1511
        %1586 = vst [vmem:[%s260 + $0xf8] sm:$0xff] %v1513
        %1587 = vst [vmem:[%s260 + $0x100] sm:$0xff] %v1404
        %1588 = vst [vmem:[%s260 + $0x108] sm:$0xff] %v1406
        %1589 = vst [vmem:[%s260 + $0x110] sm:$0xff] %v1517
        %1590 = vst [vmem:[%s260 + $0x118] sm:$0xff] %v1519
        %1591 = vst [vmem:[%s260 + $0x120] sm:$0xff] %v1408
        %1592 = vst [vmem:[%s260 + $0x128] sm:$0xff] %v1410
        %1593 = vst [vmem:[%s260 + $0x130] sm:$0xff] %v1521
        %1594 = vst [vmem:[%s260 + $0x138] sm:$0xff] %v1523
        %1595 = vst [vmem:[%s260 + $0x140] sm:$0xff] %v1414
        %1596 = vst [vmem:[%s260 + $0x148] sm:$0xff] %v1416
        %1597 = vst [vmem:[%s260 + $0x150] sm:$0xff] %v1527
        %1598 = vst [vmem:[%s260 + $0x158] sm:$0xff] %v1529
        %1599 = vst [vmem:[%s260 + $0x160] sm:$0xff] %v1418
        %1600 = vst [vmem:[%s260 + $0x168] sm:$0xff] %v1420
        %1601 = vst [vmem:[%s260 + $0x170] sm:$0xff] %v1531
        %1602 = vst [vmem:[%s260 + $0x178] sm:$0xff] %v1533
        %1603 = vst [vmem:[%s260 + $0x180] sm:$0xff] %v1424
        %1604 = vst [vmem:[%s260 + $0x188] sm:$0xff] %v1426
        %1605 = vst [vmem:[%s260 + $0x190] sm:$0xff] %v1537
        %1606 = vst [vmem:[%s260 + $0x198] sm:$0xff] %v1539
        %1607 = vst [vmem:[%s260 + $0x1a0] sm:$0xff] %v1428
        %1608 = vst [vmem:[%s260 + $0x1a8] sm:$0xff] %v1430
        %1609 = vst [vmem:[%s260 + $0x1b0] sm:$0xff] %v1541
        %1610 = vst [vmem:[%s260 + $0x1b8] sm:$0xff] %v1543
        %1611 = vst [vmem:[%s260 + $0x1c0] sm:$0xff] %v1434
        %1612 = vst [vmem:[%s260 + $0x1c8] sm:$0xff] %v1436
        %1613 = vst [vmem:[%s260 + $0x1d0] sm:$0xff] %v1547
        %1614 = vst [vmem:[%s260 + $0x1d8] sm:$0xff] %v1549
        %1615 = vst [vmem:[%s260 + $0x1e0] sm:$0xff] %v1438
        %1616 = vst [vmem:[%s260 + $0x1e8] sm:$0xff] %v1440
        %1617 = vst [vmem:[%s260 + $0x1f0] sm:$0xff] %v1551
        %1618 = vst [vmem:[%s260 + $0x1f8] sm:$0xff] %v1553
        %s1619 = sand.u32 %s156, 1
        %s1620 = scalar_lea.sflag [#allocation4], %s1619
        %s1621 = sand.u32 %s156, 1
        %s1622 = smul.addr %s1621, 512
        %s1623 = scalar_lea.vmem [#allocation5], %s1622
        // Predicated region
        $region45: #{tpu_custom_call.1} parent=39 // pred_check
          %p1624 = pneg %p166
        $region46: #{tpu_custom_call.1} parent=39 // pred_check_branch
          %1626 = sbr.rel (%p1624) target = $region48
        $region47: #{tpu_custom_call.1} parent=39 // pred_region
          %s1627 = smul.u32 4, %s27
          %s1629 = ssub.s32 8192, 8192
          %1630 = vsyncadd %s1620, %s1629
          %s1631 = smul.addr %s26, 128
          %s1632 = sadd.s32 %s1627, %s1631
          %s1633 = smul.addr %s1632, 128
          %s1634 = scalar_lea.hbm %s5, %s1633
          %s1635 = sshll.u32 %s1623, 4
          %s1636 = int_to_ptr.vmem [resolvable:$true] %s1635
          %1641 = dma.vmem_to_hbm [thread:$0]  %s1636, 8192, %s1634, %s1620, 512, 1024, 32
        $region48: #{tpu_custom_call.1} parent=39 // pred_fallthru
          _
      $region40: #{tpu_custom_call.1} parent=5 // pred_fallthru
        _
      %p1642 = scmp.le.s32.totalorder 2, %s17
      // Predicated region
      $region49: #{tpu_custom_call.1} parent=5 // pred_check
        %p1643 = pneg %p1642
      $region50: #{tpu_custom_call.1} parent=5 // pred_check_branch
        %1645 = sbr.rel (%p1643) target = $region52
      $region51: #{tpu_custom_call.1} parent=5 // pred_region
        %s1646 = ssub.s32 %s17, 2
        // Predicated region
        $region53: #{tpu_custom_call.1} parent=51 // pred_check
          %p1647 = pneg %p172
        $region54: #{tpu_custom_call.1} parent=51 // pred_check_branch
          %1649 = sbr.rel (%p1647) target = $region56
        $region55: #{tpu_custom_call.1} parent=51 // pred_region
          %s1650 = sand.u32 %s157, 1
          %s1651 = scalar_lea.sflag [#allocation4], %s1650
          %s1652 = sand.u32 %s157, 1
          %s1653 = smul.addr %s1652, 512
          %s1654 = scalar_lea.vmem [#allocation5], %s1653
          %1655 = dma.done %s1651, 8192
        $region56: #{tpu_custom_call.1} parent=51 // pred_fallthru
          _
      $region52: #{tpu_custom_call.1} parent=5 // pred_fallthru
        _
    $region6: #{tpu_custom_call.1} parent=1 // loop_footer
      %s21 = sadd.s32 1, %s17
    $region7: #{tpu_custom_call.1} parent=1 // loop_footer_branch
      %16 = sbr.rel target = $region3
    $region8: #{tpu_custom_call.1} parent=1 // loop_exit
      _
    %1656 = vsyncpa [#allocation3], 1
    %s1657 = scalar_lea.sflag [#allocation3], 1
    %1658 = vsyncpa %s1657, 1
    %1659 = vsyncpa [#allocation4], 1
    %s1660 = scalar_lea.sflag [#allocation4], 1
    %1661 = vsyncpa %s1660, 1

</llo_original>
